<compile_context>
chip_gen: v7x
topology: tpu7x:2x2x1
jax: 0.10.0
libtpu: 0.0.40
codegen_flags: <defaults>
</compile_context>

<pallas_src>
import functools

import jax
import jax.numpy as jnp
import numpy as np
from jax.experimental import pallas as pl
from jax.experimental.pallas import tpu as pltpu


# ----------------------------------------------------------------------------
# Pallas kernel: one batch element per grid step.
# ----------------------------------------------------------------------------
def _inherent_relation_kernel(x_ref, wqkv_ref, bqkv_ref, g_ref, beta_ref,
                              o_ref, *, num_heads):
    # x_ref block: (1, S, C) for the current batch element.
    S, C = x_ref.shape[1], x_ref.shape[2]
    d = C // num_heads

    x = x_ref[0].astype(jnp.float32)                                # [S, C]

    # Fused Q/K/V projection: one MXU matmul + one bias add.
    qkv = jnp.dot(x, wqkv_ref[...].astype(jnp.float32),
                  preferred_element_type=jnp.float32)               # [S, 3C]
    qkv = qkv + bqkv_ref[...].astype(jnp.float32)

    q = qkv[:, 0 * C:1 * C].reshape(S, num_heads, d)
    k = qkv[:, 1 * C:2 * C].reshape(S, num_heads, d)
    v = qkv[:, 2 * C:3 * C].reshape(S, num_heads, d)

    # Batched per-head attention (no Python head loop, no concatenate).
    scale = 1.0 / (C ** 0.5)        # PyTorch divides by hidden_size ** 0.5
    scores = jnp.einsum('shd,thd->hst', q, k,
                        preferred_element_type=jnp.float32) * scale  # [H,S,S]
    m = jnp.max(scores, axis=-1, keepdims=True)
    e = jnp.exp(scores - m)
    attn = e / jnp.sum(e, axis=-1, keepdims=True)
    out = jnp.einsum('hst,thd->shd', attn, v,
                     preferred_element_type=jnp.float32)             # [S,H,d]
    out = out.reshape(S, C)

    # Residual + LayerNorm (lane-local last-axis reductions).
    y = out + x
    mu = jnp.mean(y, axis=-1, keepdims=True)
    var = jnp.mean(jnp.square(y - mu), axis=-1, keepdims=True)
    yn = ((y - mu) * jax.lax.rsqrt(var + 1e-5)
          * g_ref[...].astype(jnp.float32)
          + beta_ref[...].astype(jnp.float32))
    o_ref[0] = yn.astype(o_ref.dtype)


def inherent_relation(x, fused_params, num_heads):
    """x: [B, S, C] token-major. Returns LayerNorm(MHSA(x) + x), [B, S, C]."""
    B, S, C = x.shape
    wqkv = fused_params['wqkv']      # [C, 3C] — pre-transposed & fused at init
    bqkv = fused_params['bqkv']      # [1, 3C]
    ln_g = fused_params['ln_g']      # [1, C]
    ln_b = fused_params['ln_b']      # [1, C]

    kern = functools.partial(_inherent_relation_kernel, num_heads=num_heads)
    return pl.pallas_call(
        kern,
        out_shape=jax.ShapeDtypeStruct((B, S, C), x.dtype),
        grid=(B,),
        in_specs=[
            pl.BlockSpec((1, S, C), lambda b: (b, 0, 0)),     # per-batch block
            pl.BlockSpec((C, 3 * C), lambda b: (0, 0)),       # weights resident
            pl.BlockSpec((1, 3 * C), lambda b: (0, 0)),
            pl.BlockSpec((1, C), lambda b: (0, 0)),
            pl.BlockSpec((1, C), lambda b: (0, 0)),
        ],
        out_specs=pl.BlockSpec((1, S, C), lambda b: (b, 0, 0)),
        compiler_params=pltpu.CompilerParams(
            dimension_semantics=("parallel",)),
    )(x, wqkv, bqkv, ln_g, ln_b)


# ----------------------------------------------------------------------------
# Parameters: PyTorch-layout raw weights + one-time fusion/pre-transpose.
# ----------------------------------------------------------------------------
def init_raw_params(key, hidden_size):
    C = hidden_size
    ks = jax.random.split(key, 8)
    s = 1.0 / (C ** 0.5)

    def lin_w(k):   # PyTorch nn.Linear weight layout: [out, in]
        return jax.random.uniform(k, (C, C), jnp.float32, -s, s)

    def lin_b(k):
        return jax.random.uniform(k, (C,), jnp.float32, -s, s)

    return dict(
        wq=lin_w(ks[0]), bq=lin_b(ks[1]),
        wk=lin_w(ks[2]), bk=lin_b(ks[3]),
        wv=lin_w(ks[4]), bv=lin_b(ks[5]),
        ln_g=jnp.ones((C,), jnp.float32),
        ln_b=jnp.zeros((C,), jnp.float32),
    )


def fuse_params(raw):
    """Pre-transpose (x @ W.T == x @ W_T) and fuse Q|K|V once, outside the
    forward pass, so the kernel sees a single [C, 3C] weight and [1, 3C] bias."""
    C = raw['wq'].shape[0]
    wqkv = jnp.concatenate([raw['wq'].T, raw['wk'].T, raw['wv'].T], axis=1)
    bqkv = jnp.concatenate([raw['bq'], raw['bk'], raw['bv']]).reshape(1, 3 * C)
    return dict(wqkv=wqkv, bqkv=bqkv,
                ln_g=raw['ln_g'].reshape(1, C),
                ln_b=raw['ln_b'].reshape(1, C))


# ----------------------------------------------------------------------------
# Pure-JAX reference (mirrors the PyTorch module exactly).
# ----------------------------------------------------------------------------
def inherent_relation_ref(x, raw, num_heads):
    B, S, C = x.shape
    d = C // num_heads
    q = x @ raw['wq'].T + raw['bq']
    k = x @ raw['wk'].T + raw['bk']
    v = x @ raw['wv'].T + raw['bv']
    q = q.reshape(B, S, num_heads, d).transpose(0, 2, 1, 3)
    k = k.reshape(B, S, num_heads, d).transpose(0, 2, 1, 3)
    v = v.reshape(B, S, num_heads, d).transpose(0, 2, 1, 3)
    scores = jnp.einsum('bhsd,bhtd->bhst', q, k) / (C ** 0.5)
    attn = jax.nn.softmax(scores, axis=-1)
    out = jnp.einsum('bhst,bhtd->bhsd', attn, v)
    out = out.transpose(0, 2, 1, 3).reshape(B, S, C)
    y = out + x
    mu = jnp.mean(y, axis=-1, keepdims=True)
    var = jnp.mean(jnp.square(y - mu), axis=-1, keepdims=True)
    return (y - mu) / jnp.sqrt(var + 1e-5) * raw['ln_g'] + raw['ln_b']


# ----------------------------------------------------------------------------
if __name__ == "__main__":
    B, S, C = 2, 8, 32
    num_heads = 4

    key = jax.random.PRNGKey(0)
    k_param, k_x = jax.random.split(key)
    raw = init_raw_params(k_param, C)
    fused = fuse_params(raw)

    x = jax.random.normal(k_x, (B, S, C), jnp.float32)

    out = inherent_relation(x, fused, num_heads)
    out = jax.block_until_ready(out)

    ref = jax.block_until_ready(inherent_relation_ref(x, raw, num_heads))

    assert out.shape == (B, S, C)
    np.testing.assert_allclose(np.asarray(out), np.asarray(ref),
                               rtol=1e-4, atol=1e-4)
    print("KERNEL_OK")
</pallas_src>

<mosaic_0001>
module attributes {stable_mosaic.version = 11 : i64} {
  func.func @_inherent_relation_kernel(%arg0: i32, %arg1: memref<1x8x32xf32, #tpu.memory_space<vmem>>, %arg2: memref<32x96xf32, #tpu.memory_space<vmem>>, %arg3: memref<1x96xf32, #tpu.memory_space<vmem>>, %arg4: memref<1x32xf32, #tpu.memory_space<vmem>>, %arg5: memref<1x32xf32, #tpu.memory_space<vmem>>, %arg6: memref<1x8x32xf32, #tpu.memory_space<vmem>>) attributes {dimension_semantics = [#tpu.dimension_semantics<parallel>], iteration_bounds = array<i64: 2>, scalar_prefetch = 0 : i64, scratch_operands = 0 : i64, tpu.core_type = #tpu.core_type<tc>, window_params = [{transform_indices = @transform_0, window_bounds = array<i64: 1, 8, 32>}, {pipeline_mode = #tpu.pipeline_mode<synchronous>, transform_indices = @transform_1, window_bounds = array<i64: 32, 96>}, {pipeline_mode = #tpu.pipeline_mode<synchronous>, transform_indices = @transform_2, window_bounds = array<i64: 1, 96>}, {pipeline_mode = #tpu.pipeline_mode<synchronous>, transform_indices = @transform_3, window_bounds = array<i64: 1, 32>}, {pipeline_mode = #tpu.pipeline_mode<synchronous>, transform_indices = @transform_4, window_bounds = array<i64: 1, 32>}, {transform_indices = @transform_5, window_bounds = array<i64: 1, 8, 32>}]} {
    %c0 = arith.constant 0 : index
    %c0_0 = arith.constant 0 : index
    %c0_1 = arith.constant 0 : index
    %0 = vector.load %arg1[%c0, %c0_0, %c0_1] : memref<1x8x32xf32, #tpu.memory_space<vmem>>, vector<1x8x32xf32>
    %1 = vector.shape_cast %0 : vector<1x8x32xf32> to vector<8x32xf32>
    %c0_2 = arith.constant 0 : index
    %c0_3 = arith.constant 0 : index
    %2 = vector.load %arg2[%c0_2, %c0_3] : memref<32x96xf32, #tpu.memory_space<vmem>>, vector<32x96xf32>
    %cst = arith.constant dense<0.000000e+00> : vector<8x96xf32>
    %3 = tpu.matmul %1, %2, %cst {dimension_numbers = #tpu.dot_dimension_numbers<[1], [0], [0], [1], [0, 0, 1, 1], [], []>} : vector<8x32xf32>, vector<32x96xf32>, vector<8x96xf32> -> vector<8x96xf32>
    %c0_4 = arith.constant 0 : index
    %c0_5 = arith.constant 0 : index
    %4 = vector.load %arg3[%c0_4, %c0_5] : memref<1x96xf32, #tpu.memory_space<vmem>>, vector<1x96xf32>
    %5 = vector.broadcast %4 : vector<1x96xf32> to vector<8x96xf32>
    %6 = arith.addf %3, %5 : vector<8x96xf32>
    %7 = vector.extract_strided_slice %6 {offsets = [0, 0], sizes = [8, 32], strides = [1, 1]} : vector<8x96xf32> to vector<8x32xf32>
    %8 = vector.shape_cast %7 : vector<8x32xf32> to vector<8x4x8xf32>
    %9 = vector.extract_strided_slice %6 {offsets = [0, 32], sizes = [8, 32], strides = [1, 1]} : vector<8x96xf32> to vector<8x32xf32>
    %10 = vector.shape_cast %9 : vector<8x32xf32> to vector<8x4x8xf32>
    %11 = vector.extract_strided_slice %6 {offsets = [0, 64], sizes = [8, 32], strides = [1, 1]} : vector<8x96xf32> to vector<8x32xf32>
    %12 = vector.shape_cast %11 : vector<8x32xf32> to vector<8x4x8xf32>
    "tpu.trace_start"() <{level = 10 : i32, message = "shd,thd->hst"}> : () -> ()
    %cst_6 = arith.constant dense<0.000000e+00> : vector<4x8x8xf32>
    %13 = tpu.matmul %8, %10, %cst_6 {dimension_numbers = #tpu.dot_dimension_numbers<[2], [2], [0], [0], [0, 1, 0, 0, 1, 0], [1], [1]>} : vector<8x4x8xf32>, vector<8x4x8xf32>, vector<4x8x8xf32> -> vector<4x8x8xf32>
    "tpu.trace_stop"() : () -> ()
    %cst_7 = arith.constant 0.176776692 : f32
    %14 = vector.broadcast %cst_7 : f32 to vector<4x8x8xf32>
    %15 = arith.mulf %13, %14 : vector<4x8x8xf32>
    %cst_8 = arith.constant dense<0xFF800000> : vector<4x8xf32>
    %16 = vector.multi_reduction <maximumf>, %15, %cst_8 [2] : vector<4x8x8xf32> to vector<4x8xf32>
    %17 = vector.shape_cast %16 : vector<4x8xf32> to vector<4x8x1xf32>
    %18 = vector.broadcast %17 : vector<4x8x1xf32> to vector<4x8x8xf32>
    %19 = arith.subf %15, %18 : vector<4x8x8xf32>
    %20 = math.exp %19 : vector<4x8x8xf32>
    %cst_9 = arith.constant dense<0.000000e+00> : vector<4x8xf32>
    %21 = vector.multi_reduction <add>, %20, %cst_9 [2] : vector<4x8x8xf32> to vector<4x8xf32>
    %22 = vector.shape_cast %21 : vector<4x8xf32> to vector<4x8x1xf32>
    %23 = vector.broadcast %22 : vector<4x8x1xf32> to vector<4x8x8xf32>
    %24 = arith.divf %20, %23 : vector<4x8x8xf32>
    "tpu.trace_start"() <{level = 10 : i32, message = "hst,thd->shd"}> : () -> ()
    %cst_10 = arith.constant dense<0.000000e+00> : vector<4x8x8xf32>
    %25 = tpu.matmul %12, %24, %cst_10 {dimension_numbers = #tpu.dot_dimension_numbers<[0], [2], [2], [1], [0, 1, 0, 2, 1, 1], [1], [0]>} : vector<8x4x8xf32>, vector<4x8x8xf32>, vector<4x8x8xf32> -> vector<4x8x8xf32>
    %26 = tpu.transpose %25, [2, 0, 1] : vector<4x8x8xf32> -> vector<8x4x8xf32>
    "tpu.trace_stop"() : () -> ()
    %27 = vector.shape_cast %26 : vector<8x4x8xf32> to vector<8x32xf32>
    %28 = arith.addf %27, %1 : vector<8x32xf32>
    %cst_11 = arith.constant dense<0.000000e+00> : vector<8xf32>
    %29 = vector.multi_reduction <add>, %28, %cst_11 [1] : vector<8x32xf32> to vector<8xf32>
    %30 = vector.shape_cast %29 : vector<8xf32> to vector<8x1xf32>
    %cst_12 = arith.constant 3.200000e+01 : f32
    %31 = vector.broadcast %cst_12 : f32 to vector<8x1xf32>
    %32 = arith.divf %30, %31 : vector<8x1xf32>
    %33 = vector.broadcast %32 : vector<8x1xf32> to vector<8x32xf32>
    %34 = arith.subf %28, %33 : vector<8x32xf32>
    %35 = arith.mulf %34, %34 : vector<8x32xf32>
    %cst_13 = arith.constant dense<0.000000e+00> : vector<8xf32>
    %36 = vector.multi_reduction <add>, %35, %cst_13 [1] : vector<8x32xf32> to vector<8xf32>
    %37 = vector.shape_cast %36 : vector<8xf32> to vector<8x1xf32>
    %cst_14 = arith.constant 3.200000e+01 : f32
    %38 = vector.broadcast %cst_14 : f32 to vector<8x1xf32>
    %39 = arith.divf %37, %38 : vector<8x1xf32>
    %40 = vector.broadcast %32 : vector<8x1xf32> to vector<8x32xf32>
    %41 = arith.subf %28, %40 : vector<8x32xf32>
    %cst_15 = arith.constant 9.99999974E-6 : f32
    %42 = vector.broadcast %cst_15 : f32 to vector<8x1xf32>
    %43 = arith.addf %39, %42 : vector<8x1xf32>
    %44 = math.rsqrt %43 : vector<8x1xf32>
    %45 = vector.broadcast %44 : vector<8x1xf32> to vector<8x32xf32>
    %46 = arith.mulf %41, %45 : vector<8x32xf32>
    %c0_16 = arith.constant 0 : index
    %c0_17 = arith.constant 0 : index
    %47 = vector.load %arg4[%c0_16, %c0_17] : memref<1x32xf32, #tpu.memory_space<vmem>>, vector<1x32xf32>
    %48 = vector.broadcast %47 : vector<1x32xf32> to vector<8x32xf32>
    %49 = arith.mulf %46, %48 : vector<8x32xf32>
    %c0_18 = arith.constant 0 : index
    %c0_19 = arith.constant 0 : index
    %50 = vector.load %arg5[%c0_18, %c0_19] : memref<1x32xf32, #tpu.memory_space<vmem>>, vector<1x32xf32>
    %51 = vector.broadcast %50 : vector<1x32xf32> to vector<8x32xf32>
    %52 = arith.addf %49, %51 : vector<8x32xf32>
    %c0_20 = arith.constant 0 : index
    %c0_21 = arith.constant 0 : index
    %c0_22 = arith.constant 0 : index
    %53 = vector.load %arg6[%c0_20, %c0_21, %c0_22] : memref<1x8x32xf32, #tpu.memory_space<vmem>>, vector<1x8x32xf32>
    %54 = vector.shape_cast %53 : vector<1x8x32xf32> to vector<8x32xf32>
    %55 = vector.shape_cast %52 : vector<8x32xf32> to vector<1x8x32xf32>
    tpu.vector_store %arg6[%c0_20, %c0_21, %c0_22], %55 {strides = array<i32>} : memref<1x8x32xf32, #tpu.memory_space<vmem>>, vector<1x8x32xf32>,
    return
  }
  func.func @transform_0(%arg0: i32) -> (i32, i32, i32) {
    %c0_i32 = arith.constant 0 : i32
    %c0_i32_0 = arith.constant 0 : i32
    %c0_i32_1 = arith.constant 0 : i32
    return %arg0, %c0_i32, %c0_i32_0 : i32, i32, i32
  }
  func.func @transform_1(%arg0: i32) -> (i32, i32) {
    %c0_i32 = arith.constant 0 : i32
    %c0_i32_0 = arith.constant 0 : i32
    %c0_i32_1 = arith.constant 0 : i32
    return %c0_i32, %c0_i32_0 : i32, i32
  }
  func.func @transform_2(%arg0: i32) -> (i32, i32) {
    %c0_i32 = arith.constant 0 : i32
    %c0_i32_0 = arith.constant 0 : i32
    %c0_i32_1 = arith.constant 0 : i32
    return %c0_i32, %c0_i32_0 : i32, i32
  }
  func.func @transform_3(%arg0: i32) -> (i32, i32) {
    %c0_i32 = arith.constant 0 : i32
    %c0_i32_0 = arith.constant 0 : i32
    %c0_i32_1 = arith.constant 0 : i32
    return %c0_i32, %c0_i32_0 : i32, i32
  }
  func.func @transform_4(%arg0: i32) -> (i32, i32) {
    %c0_i32 = arith.constant 0 : i32
    %c0_i32_0 = arith.constant 0 : i32
    %c0_i32_1 = arith.constant 0 : i32
    return %c0_i32, %c0_i32_0 : i32, i32
  }
  func.func @transform_5(%arg0: i32) -> (i32, i32, i32) {
    %c0_i32 = arith.constant 0 : i32
    %c0_i32_0 = arith.constant 0 : i32
    %c0_i32_1 = arith.constant 0 : i32
    return %arg0, %c0_i32, %c0_i32_0 : i32, i32, i32
  }
}

</mosaic_0001>

<llo_original>
// kernel: tpu_custom_call.1
$region0: #{tpu_custom_call.1}
  #allocation0 [shape = 'u32[]', space=smem, size = 0x4, offset = 0x4, fixed_abs, tag = 'smem constant byte address 0x4 - core index']
  #allocation1 [shape = 'u32[144,128]{1,0:T(1,128)}', space=vmem, size = 0x12000, scoped, tag = 'internal scratch']
  %s0 = inlined_call_operand.hbm [shape: f32[2,8,32], index: 0, kind: input, shape index: {}]
  %s1 = inlined_call_operand.hbm [shape: f32[32,96], index: 1, kind: input, shape index: {}]
  %s2 = inlined_call_operand.vmem [shape: f32[1,96], index: 2, kind: input, shape index: {}]
  %s3 = inlined_call_operand.vmem [shape: f32[1,32], index: 3, kind: input, shape index: {}]
  %s4 = inlined_call_operand.vmem [shape: f32[1,32], index: 4, kind: input, shape index: {}]
  %s5 = inlined_call_operand.hbm [shape: f32[2,8,32], index: 5, kind: output, shape index: {}]
  %s6 = sld [smem:[#allocation0]]
  $region61: #{tpu_custom_call.1} parent=0
    _
  %s8 = ssub.s32 1, %s6
  %s9 = scalar_select 0, %s8, %s6
  $region1: #{tpu_custom_call.1} parent=0
    #allocation2 [shape = 'u8[8192]{0}', space=vmem, size = 0x2000, scoped, tag = 'input window, operand 0']
    #allocation3 [shape = 's32[2]{0}', space=sflag, size = 0x8, scoped, tag = 'scoped memory for tpu_custom_call.1']
    #allocation4 [shape = 's32[2]{0}', space=sflag, size = 0x8, scoped, tag = 'scoped memory for tpu_custom_call.1']
    #allocation5 [shape = 'u8[16384]{0}', space=vmem, size = 0x4000, scoped, tag = 'input window, operand 1, single buffered']
    #allocation6 [shape = 's32[1]{0}', space=sflag, size = 0x4, scoped, tag = 'scoped memory for tpu_custom_call.1']
    #allocation7 [shape = 'u8[8192]{0}', space=vmem, size = 0x2000, scoped, tag = 'output window, operand 0']
    %10 = vsyncpa [#allocation3], 0
    %s11 = scalar_lea.sflag [#allocation3], 1
    %12 = vsyncpa %s11, 0
    %13 = vsyncpa [#allocation6], 0
    %14 = vsyncpa [#allocation4], 0
    %s15 = scalar_lea.sflag [#allocation4], 1
    %16 = vsyncpa %s15, 0
    loop: start=0, step=1, limit=4
    $region2: #{tpu_custom_call.1} parent=1 // loop_pre_header
      _
    $region3: #{tpu_custom_call.1} parent=1 // loop_header
      %s18 = sphi 0, %s22
      %p19 = scmp.ge.s32.totalorder %s18, 4
      %s28 = sphi 0, %s30
      %s31 = sphi 0, %s28
      %s32 = sphi 0, %s31
      %s48 = sphi 0, %s32
      %s52 = sphi 0, %s52
      %s54 = sphi 0, %s52
      %s55 = sphi 0, %s54
      %s69 = sphi 0, %s55
      %s73 = sphi 0, %s73
      %s75 = sphi 0, %s73
      %s76 = sphi 0, %s75
      %s90 = sphi 0, %s76
      %s94 = sphi 0, %s94
      %s96 = sphi 0, %s94
      %s97 = sphi 0, %s96
      %s111 = sphi 0, %s97
      %s115 = sphi 0, %s115
      %s117 = sphi 0, %s115
      %s118 = sphi 0, %s117
      %s132 = sphi 0, %s118
      %s138 = sphi 0, %s140
      %s141 = sphi 0, %s138
      %s142 = sphi 0, %s141
      %s158 = sphi 0, %s142
    $region4: #{tpu_custom_call.1} parent=1 // loop_header_branch
      %21 = sbr.rel (%p19) target = $region8
    $region5: #{tpu_custom_call.1} parent=1 // loop_body
      %s23 = ssub.s32 %s18, 1
      %s24 = ssub.s32 %s18, 2
      %s25 = sadd.s32 %s18, 1
      %s26 = ssub.s32 %s18, %s25
      %p27 = scmp.eq.s32.totalorder %s26, 0
      %s29 = sadd.s32 %s28, 1
      %s30 = scalar_select %p27, %s28, %s29
      %p33 = pneg %p27
      %p34 = scmp.eq.s32.totalorder %s18, 1
      %p35 = por %p33, %p34
      %p36 = scmp.ne.s32.totalorder %s28, %s31
      %p37 = scmp.eq.s32.totalorder %s18, 0
      %p38 = por %p36, %p37
      %p39 = scmp.ne.s32.totalorder %s28, %s31
      %p40 = scmp.eq.s32.totalorder %s23, 1
      %p41 = por %p39, %p40
      %p42 = scmp.ne.s32.totalorder %s31, %s32
      %p43 = scmp.eq.s32.totalorder %s23, 0
      %p44 = por %p42, %p43
      %p45 = scmp.ne.s32.totalorder %s31, %s32
      %p46 = scmp.eq.s32.totalorder %s24, 1
      %p47 = por %p45, %p46
      %p49 = scmp.ne.s32.totalorder %s32, %s48
      %p50 = scmp.eq.s32.totalorder %s24, 0
      %p51 = por %p49, %p50
      %s53 = sadd.s32 %s52, 1
      %p56 = scmp.eq.s32.totalorder %s18, 1
      %p57 = scmp.ne.s32.totalorder %s52, %s54
      %p58 = scmp.eq.s32.totalorder %s18, 0
      %p59 = por %p57, %p58
      %p60 = scmp.ne.s32.totalorder %s52, %s54
      %p61 = scmp.eq.s32.totalorder %s23, 1
      %p62 = por %p60, %p61
      %p63 = scmp.ne.s32.totalorder %s54, %s55
      %p64 = scmp.eq.s32.totalorder %s23, 0
      %p65 = por %p63, %p64
      %p66 = scmp.ne.s32.totalorder %s54, %s55
      %p67 = scmp.eq.s32.totalorder %s24, 1
      %p68 = por %p66, %p67
      %p70 = scmp.ne.s32.totalorder %s55, %s69
      %p71 = scmp.eq.s32.totalorder %s24, 0
      %p72 = por %p70, %p71
      %s74 = sadd.s32 %s73, 1
      %p77 = scmp.eq.s32.totalorder %s18, 1
      %p78 = scmp.ne.s32.totalorder %s73, %s75
      %p79 = scmp.eq.s32.totalorder %s18, 0
      %p80 = por %p78, %p79
      %p81 = scmp.ne.s32.totalorder %s73, %s75
      %p82 = scmp.eq.s32.totalorder %s23, 1
      %p83 = por %p81, %p82
      %p84 = scmp.ne.s32.totalorder %s75, %s76
      %p85 = scmp.eq.s32.totalorder %s23, 0
      %p86 = por %p84, %p85
      %p87 = scmp.ne.s32.totalorder %s75, %s76
      %p88 = scmp.eq.s32.totalorder %s24, 1
      %p89 = por %p87, %p88
      %p91 = scmp.ne.s32.totalorder %s76, %s90
      %p92 = scmp.eq.s32.totalorder %s24, 0
      %p93 = por %p91, %p92
      %s95 = sadd.s32 %s94, 1
      %p98 = scmp.eq.s32.totalorder %s18, 1
      %p99 = scmp.ne.s32.totalorder %s94, %s96
      %p100 = scmp.eq.s32.totalorder %s18, 0
      %p101 = por %p99, %p100
      %p102 = scmp.ne.s32.totalorder %s94, %s96
      %p103 = scmp.eq.s32.totalorder %s23, 1
      %p104 = por %p102, %p103
      %p105 = scmp.ne.s32.totalorder %s96, %s97
      %p106 = scmp.eq.s32.totalorder %s23, 0
      %p107 = por %p105, %p106
      %p108 = scmp.ne.s32.totalorder %s96, %s97
      %p109 = scmp.eq.s32.totalorder %s24, 1
      %p110 = por %p108, %p109
      %p112 = scmp.ne.s32.totalorder %s97, %s111
      %p113 = scmp.eq.s32.totalorder %s24, 0
      %p114 = por %p112, %p113
      %s116 = sadd.s32 %s115, 1
      %p119 = scmp.eq.s32.totalorder %s18, 1
      %p120 = scmp.ne.s32.totalorder %s115, %s117
      %p121 = scmp.eq.s32.totalorder %s18, 0
      %p122 = por %p120, %p121
      %p123 = scmp.ne.s32.totalorder %s115, %s117
      %p124 = scmp.eq.s32.totalorder %s23, 1
      %p125 = por %p123, %p124
      %p126 = scmp.ne.s32.totalorder %s117, %s118
      %p127 = scmp.eq.s32.totalorder %s23, 0
      %p128 = por %p126, %p127
      %p129 = scmp.ne.s32.totalorder %s117, %s118
      %p130 = scmp.eq.s32.totalorder %s24, 1
      %p131 = por %p129, %p130
      %p133 = scmp.ne.s32.totalorder %s118, %s132
      %p134 = scmp.eq.s32.totalorder %s24, 0
      %p135 = por %p133, %p134
      %s136 = ssub.s32 %s18, %s25
      %p137 = scmp.eq.s32.totalorder %s136, 0
      %s139 = sadd.s32 %s138, 1
      %s140 = scalar_select %p137, %s138, %s139
      %p143 = pneg %p137
      %p144 = scmp.eq.s32.totalorder %s18, 1
      %p145 = por %p143, %p144
      %p146 = scmp.ne.s32.totalorder %s138, %s141
      %p147 = scmp.eq.s32.totalorder %s18, 0
      %p148 = por %p146, %p147
      %p149 = scmp.ne.s32.totalorder %s138, %s141
      %p150 = scmp.eq.s32.totalorder %s23, 1
      %p151 = por %p149, %p150
      %p152 = scmp.ne.s32.totalorder %s141, %s142
      %p153 = scmp.eq.s32.totalorder %s23, 0
      %p154 = por %p152, %p153
      %p155 = scmp.ne.s32.totalorder %s141, %s142
      %p156 = scmp.eq.s32.totalorder %s24, 1
      %p157 = por %p155, %p156
      %p159 = scmp.ne.s32.totalorder %s142, %s158
      %p160 = scmp.eq.s32.totalorder %s24, 0
      %p161 = por %p159, %p160
      %p162 = scmp.le.s32.totalorder 1, %s18
      %p163 = scmp.lt.s32.totalorder %s18, 3
      %p164 = pnand %p162, %p163
      %p165 = pneg %p164
      // Predicated region
      $region9: #{tpu_custom_call.1} parent=5 // pred_check
        _
      $region10: #{tpu_custom_call.1} parent=5 // pred_check_branch
        %167 = sbr.rel (%p164) target = $region12
      $region11: #{tpu_custom_call.1} parent=5 // pred_region
        %s168 = ssub.s32 %s18, 1
        // Predicated region
        $region13: #{tpu_custom_call.1} parent=11 // pred_check
          %p169 = pneg %p65
        $region14: #{tpu_custom_call.1} parent=11 // pred_check_branch
          %171 = sbr.rel (%p169) target = $region16
        $region15: #{tpu_custom_call.1} parent=11 // pred_region
          %s173 = ssub.s32 512, 512
          %174 = vsyncadd [#allocation6], %s173
          %s175 = sshll.u32 [#allocation5], 4
          %s176 = int_to_ptr.vmem [resolvable:$true] %s175
          %181 = dma.hbm_to_vmem [thread:$0]  %s1, 512, %s176, [#allocation6], 128, 128, 8
        $region16: #{tpu_custom_call.1} parent=11 // pred_fallthru
          _
        // Predicated region
        $region17: #{tpu_custom_call.1} parent=11 // pred_check
          %p182 = pneg %p86
        $region18: #{tpu_custom_call.1} parent=11 // pred_check_branch
          %184 = sbr.rel (%p182) target = $region20
        $region19: #{tpu_custom_call.1} parent=11 // pred_region
          _
        $region20: #{tpu_custom_call.1} parent=11 // pred_fallthru
          _
        // Predicated region
        $region21: #{tpu_custom_call.1} parent=11 // pred_check
          %p185 = pneg %p107
        $region22: #{tpu_custom_call.1} parent=11 // pred_check_branch
          %187 = sbr.rel (%p185) target = $region24
        $region23: #{tpu_custom_call.1} parent=11 // pred_region
          _
        $region24: #{tpu_custom_call.1} parent=11 // pred_fallthru
          _
        // Predicated region
        $region25: #{tpu_custom_call.1} parent=11 // pred_check
          %p188 = pneg %p128
        $region26: #{tpu_custom_call.1} parent=11 // pred_check_branch
          %190 = sbr.rel (%p188) target = $region28
        $region27: #{tpu_custom_call.1} parent=11 // pred_region
          _
        $region28: #{tpu_custom_call.1} parent=11 // pred_fallthru
          _
      $region12: #{tpu_custom_call.1} parent=5 // pred_fallthru
        _
      %p191 = scmp.lt.s32.totalorder %s18, 2
      // Predicated region
      $region29: #{tpu_custom_call.1} parent=5 // pred_check
        %p192 = pneg %p191
      $region30: #{tpu_custom_call.1} parent=5 // pred_check_branch
        %194 = sbr.rel (%p192) target = $region32
      $region31: #{tpu_custom_call.1} parent=5 // pred_region
        // Predicated region
        $region33: #{tpu_custom_call.1} parent=31 // pred_check
          %p195 = pneg %p38
        $region34: #{tpu_custom_call.1} parent=31 // pred_check_branch
          %197 = sbr.rel (%p195) target = $region36
        $region35: #{tpu_custom_call.1} parent=31 // pred_region
          %s198 = sand.u32 %s28, 1
          %s199 = scalar_lea.sflag [#allocation3], %s198
          %s200 = sand.u32 %s28, 1
          %s201 = smul.addr %s200, 8
          %s202 = scalar_lea.vmem [#allocation2], %s201
          %s204 = ssub.s32 128, 128
          %205 = vsyncadd %s199, %s204
          %s206 = smul.addr %s18, 128
          %s207 = scalar_lea.hbm %s0, %s206
          %s209 = sshll.u32 %s202, 4
          %s210 = int_to_ptr.vmem [resolvable:$true] %s209
          %212 = dma.hbm_to_vmem [thread:$0]  %s207, 128, %s210, %s199
        $region36: #{tpu_custom_call.1} parent=31 // pred_fallthru
          _
      $region32: #{tpu_custom_call.1} parent=5 // pred_fallthru
        _
      %p213 = scmp.le.s32.totalorder 1, %s18
      %p214 = scmp.lt.s32.totalorder %s18, 3
      %p215 = pnand %p213, %p214
      %p216 = pneg %p215
      // Predicated region
      $region37: #{tpu_custom_call.1} parent=5 // pred_check
        _
      $region38: #{tpu_custom_call.1} parent=5 // pred_check_branch
        %218 = sbr.rel (%p215) target = $region40
      $region39: #{tpu_custom_call.1} parent=5 // pred_region
        %s219 = ssub.s32 %s18, 1
        %s220 = sand.u32 %s31, 1
        %s221 = scalar_lea.sflag [#allocation3], %s220
        %s222 = sand.u32 %s31, 1
        %s223 = smul.addr %s222, 8
        %s224 = scalar_lea.vmem [#allocation2], %s223
        // Predicated region
        $region41: #{tpu_custom_call.1} parent=39 // pred_check
          %p225 = pneg %p44
        $region42: #{tpu_custom_call.1} parent=39 // pred_check_branch
          %227 = sbr.rel (%p225) target = $region44
        $region43: #{tpu_custom_call.1} parent=39 // pred_region
          %228 = dma.done %s221, 128
        $region44: #{tpu_custom_call.1} parent=39 // pred_fallthru
          _
        // Predicated region
        $region45: #{tpu_custom_call.1} parent=39 // pred_check
          %p229 = pneg %p65
        $region46: #{tpu_custom_call.1} parent=39 // pred_check_branch
          %231 = sbr.rel (%p229) target = $region48
        $region47: #{tpu_custom_call.1} parent=39 // pred_region
          %232 = dma.done [#allocation6], 512
        $region48: #{tpu_custom_call.1} parent=39 // pred_fallthru
          _
        %s233 = sand.u32 %s31, 1
        %s234 = scalar_lea.sflag [#allocation3], %s233
        %s235 = sand.u32 %s31, 1
        %s236 = smul.addr %s235, 8
        %s237 = scalar_lea.vmem [#allocation2], %s236
        %p238 = pneg %p44
        %p239 = pneg %p41
        %p240 = pneg %p65
        %p241 = pneg %p62
        %p242 = pneg %p86
        %p243 = pneg %p83
        %p244 = pneg %p107
        %p245 = pneg %p104
        %p246 = pneg %p128
        %p247 = pneg %p125
        %p248 = pneg %p154
        %p249 = pneg %p151
        %s250 = sand.u32 %s141, 1
        %s251 = scalar_lea.sflag [#allocation4], %s250
        %s252 = sand.u32 %s141, 1
        %s253 = smul.addr %s252, 8
        %s254 = scalar_lea.vmem [#allocation7], %s253
        %v255 = vld [vmem:[%s224] sm:$0xff]
        %v256 = vld [vmem:[#allocation5] sm:$0xff]
        %v257 = vld [vmem:[#allocation5 + $0x8] sm:$0xff]
        %v258 = vld [vmem:[#allocation5 + $0x10] sm:$0xff]
        %v259 = vld [vmem:[#allocation5 + $0x18] sm:$0xff]
        %v260 = vld [vmem:[%s2] sm:$0x1]
        %v262 = vlaneseq
        %v263 = vshrl.u32 %v262, 7
        %v264 = vsub.s32 0, %v263
        %v265 = vrot.slane %v260, %v264
        %vm267 = vcmask 261120
        %v269 = vsel %vm267, %v255, 0
        %271 = vmatprep.subr.mxu0 0.0
        %272 = vmatpush1.msra.mxu0 %v256
        %273 = vmatprep.subr.mxu0 0.0
        %274 = vmatpush1.msra.mxu0 %v257
        %275 = vmatprep.subr.mxu0 0.0
        %276 = vmatpush1.msra.mxu0 %v258
        %277 = vmatprep.subr.mxu0 0.0
        %278 = vmatpush1.msra.mxu0 %v259
        %279 = vmatprep.subr.mxu0 0.0
        %280 = vmatpush1.msra.mxu0 0.0
        %281 = vmatprep.subr.mxu0 0.0
        %282 = vmatpush1.msra.mxu0 0.0
        %283 = vmatprep.subr.mxu0 0.0
        %284 = vmatpush1.msra.mxu0 0.0
        %285 = vmatprep.subr.mxu0 0.0
        %286 = vmatpush1.msra.mxu0 0.0
        %287 = vmatprep.subr.mxu0 0.0
        %288 = vmatpush1.msra.mxu0 0.0
        %289 = vmatprep.subr.mxu0 0.0
        %290 = vmatpush1.msra.mxu0 0.0
        %291 = vmatprep.subr.mxu0 0.0
        %292 = vmatpush1.msra.mxu0 0.0
        %293 = vmatprep.subr.mxu0 0.0
        %294 = vmatpush1.msra.mxu0 0.0
        %295 = vmatprep.subr.mxu0 0.0
        %296 = vmatpush1.msra.mxu0 0.0
        %297 = vmatprep.subr.mxu0 0.0
        %298 = vmatpush1.msra.mxu0 0.0
        %299 = vmatprep.subr.mxu0 0.0
        %300 = vmatpush1.msra.mxu0 0.0
        %301 = vmatprep.subr.mxu0 0.0
        %302 = vmatpush1.msra.mxu0 0.0
        %303 = vmatprep.subr.mxu0 0.0
        %304 = vmatpush1.msra.mxu0 0.0
        %305 = vmatprep.subr.mxu0 0.0
        %306 = vmatpush1.msra.mxu0 0.0
        %307 = vmatprep.subr.mxu0 0.0
        %308 = vmatpush1.msra.mxu0 0.0
        %309 = vmatprep.subr.mxu0 0.0
        %310 = vmatpush1.msra.mxu0 0.0
        %311 = vmatprep.subr.mxu0 0.0
        %312 = vmatpush1.msra.mxu0 0.0
        %313 = vmatprep.subr.mxu0 0.0
        %314 = vmatpush1.msra.mxu0 0.0
        %315 = vmatprep.subr.mxu0 0.0
        %316 = vmatpush1.msra.mxu0 0.0
        %317 = vmatprep.subr.mxu0 0.0
        %318 = vmatpush1.msra.mxu0 0.0
        %319 = vmatprep.subr.mxu0 0.0
        %320 = vmatpush1.msra.mxu0 0.0
        %321 = vmatprep.subr.mxu0 0.0
        %322 = vmatpush1.msra.mxu0 0.0
        %323 = vmatprep.subr.mxu0 0.0
        %324 = vmatpush1.msra.mxu0 0.0
        %325 = vmatprep.subr.mxu0 0.0
        %326 = vmatpush1.msra.mxu0 0.0
        %327 = vmatprep.subr.mxu0 0.0
        %328 = vmatpush1.msra.mxu0 0.0
        %329 = vmatprep.subr.mxu0 0.0
        %330 = vmatpush1.msra.mxu0 0.0
        %331 = vmatprep.subr.mxu0 0.0
        %332 = vmatpush1.msra.mxu0 0.0
        %333 = vmatprep.subr.mxu0 0.0
        %334 = vmatpush1.msra.mxu0 0.0
        %335 = vmatprep.mubr.f32.mxu0 0.0
        %336 = vmatmul.mubr.f32.gmra.mrb[0].mxu0 %v269
        %v337 = vpop.f32.mrb[0].mxu0
        %v338 = vadd.f32 %v265, %v337
        %v339 = vpop.f32.mrb[0].mxu0
        %340 = vdwg.mxu0
        %342 = vrot.lane.b32.xlu0 %v338, 120
        %v343 = vpop.permute.xlu0 %342
        %344 = vrot.lane.b32.xlu0 %v338, 112
        %v345 = vpop.permute.xlu0 %344
        %346 = vrot.lane.b32.xlu0 %v338, 104
        %v347 = vpop.permute.xlu0 %346
        %348 = vrot.lane.b32.xlu0 %v338, 96
        %v349 = vpop.permute.xlu0 %348
        %350 = vrot.lane.b32.xlu0 %v343, 96
        %v351 = vpop.permute.xlu0 %350
        %352 = vrot.lane.b32.xlu0 %v345, 96
        %v353 = vpop.permute.xlu0 %352
        %354 = vrot.lane.b32.xlu0 %v347, 96
        %v355 = vpop.permute.xlu0 %354
        %360 = vxpose.xlu0.b32.start [1/16] %v349, 128
        %361 = vxpose.xlu0.b32.cont [2/16] 0.0, 128
        %362 = vxpose.xlu0.b32.cont [3/16] 0.0, 128
        %363 = vxpose.xlu0.b32.cont [4/16] 0.0, 128
        %364 = vxpose.xlu0.b32.cont [5/16] 0.0, 128
        %365 = vxpose.xlu0.b32.cont [6/16] 0.0, 128
        %366 = vxpose.xlu0.b32.cont [7/16] 0.0, 128
        %367 = vxpose.xlu0.b32.cont [8/16] 0.0, 128
        %368 = vxpose.xlu0.b32.cont [9/16] 0.0, 128
        %369 = vxpose.xlu0.b32.cont [10/16] 0.0, 128
        %370 = vxpose.xlu0.b32.cont [11/16] 0.0, 128
        %371 = vxpose.xlu0.b32.cont [12/16] 0.0, 128
        %372 = vxpose.xlu0.b32.cont [13/16] 0.0, 128
        %373 = vxpose.xlu0.b32.cont [14/16] 0.0, 128
        %374 = vxpose.xlu0.b32.cont [15/16] 0.0, 128
        %375 = vxpose.xlu0.b32.end [16/16] 0.0, 128
        %v376 = vpop.trf.xlu0
        %v377 = vpop.trf.xlu0
        %v378 = vpop.trf.xlu0
        %v379 = vpop.trf.xlu0
        %v380 = vpop.trf.xlu0
        %v381 = vpop.trf.xlu0
        %v382 = vpop.trf.xlu0
        %v383 = vpop.trf.xlu0
        %v384 = vpop.trf.xlu0
        %v385 = vpop.trf.xlu0
        %v386 = vpop.trf.xlu0
        %v387 = vpop.trf.xlu0
        %v388 = vpop.trf.xlu0
        %v389 = vpop.trf.xlu0
        %v390 = vpop.trf.xlu0
        %v391 = vpop.trf.xlu0
        %392 = vxpose.xlu0.b32.start [1/16] %v351, 128
        %393 = vxpose.xlu0.b32.cont [2/16] 0.0, 128
        %394 = vxpose.xlu0.b32.cont [3/16] 0.0, 128
        %395 = vxpose.xlu0.b32.cont [4/16] 0.0, 128
        %396 = vxpose.xlu0.b32.cont [5/16] 0.0, 128
        %397 = vxpose.xlu0.b32.cont [6/16] 0.0, 128
        %398 = vxpose.xlu0.b32.cont [7/16] 0.0, 128
        %399 = vxpose.xlu0.b32.cont [8/16] 0.0, 128
        %400 = vxpose.xlu0.b32.cont [9/16] 0.0, 128
        %401 = vxpose.xlu0.b32.cont [10/16] 0.0, 128
        %402 = vxpose.xlu0.b32.cont [11/16] 0.0, 128
        %403 = vxpose.xlu0.b32.cont [12/16] 0.0, 128
        %404 = vxpose.xlu0.b32.cont [13/16] 0.0, 128
        %405 = vxpose.xlu0.b32.cont [14/16] 0.0, 128
        %406 = vxpose.xlu0.b32.cont [15/16] 0.0, 128
        %407 = vxpose.xlu0.b32.end [16/16] 0.0, 128
        %v408 = vpop.trf.xlu0
        %v409 = vpop.trf.xlu0
        %v410 = vpop.trf.xlu0
        %v411 = vpop.trf.xlu0
        %v412 = vpop.trf.xlu0
        %v413 = vpop.trf.xlu0
        %v414 = vpop.trf.xlu0
        %v415 = vpop.trf.xlu0
        %v416 = vpop.trf.xlu0
        %v417 = vpop.trf.xlu0
        %v418 = vpop.trf.xlu0
        %v419 = vpop.trf.xlu0
        %v420 = vpop.trf.xlu0
        %v421 = vpop.trf.xlu0
        %v422 = vpop.trf.xlu0
        %v423 = vpop.trf.xlu0
        %424 = vxpose.xlu0.b32.start [1/16] %v353, 128
        %425 = vxpose.xlu0.b32.cont [2/16] 0.0, 128
        %426 = vxpose.xlu0.b32.cont [3/16] 0.0, 128
        %427 = vxpose.xlu0.b32.cont [4/16] 0.0, 128
        %428 = vxpose.xlu0.b32.cont [5/16] 0.0, 128
        %429 = vxpose.xlu0.b32.cont [6/16] 0.0, 128
        %430 = vxpose.xlu0.b32.cont [7/16] 0.0, 128
        %431 = vxpose.xlu0.b32.cont [8/16] 0.0, 128
        %432 = vxpose.xlu0.b32.cont [9/16] 0.0, 128
        %433 = vxpose.xlu0.b32.cont [10/16] 0.0, 128
        %434 = vxpose.xlu0.b32.cont [11/16] 0.0, 128
        %435 = vxpose.xlu0.b32.cont [12/16] 0.0, 128
        %436 = vxpose.xlu0.b32.cont [13/16] 0.0, 128
        %437 = vxpose.xlu0.b32.cont [14/16] 0.0, 128
        %438 = vxpose.xlu0.b32.cont [15/16] 0.0, 128
        %439 = vxpose.xlu0.b32.end [16/16] 0.0, 128
        %v440 = vpop.trf.xlu0
        %v441 = vpop.trf.xlu0
        %v442 = vpop.trf.xlu0
        %v443 = vpop.trf.xlu0
        %v444 = vpop.trf.xlu0
        %v445 = vpop.trf.xlu0
        %v446 = vpop.trf.xlu0
        %v447 = vpop.trf.xlu0
        %v448 = vpop.trf.xlu0
        %v449 = vpop.trf.xlu0
        %v450 = vpop.trf.xlu0
        %v451 = vpop.trf.xlu0
        %v452 = vpop.trf.xlu0
        %v453 = vpop.trf.xlu0
        %v454 = vpop.trf.xlu0
        %v455 = vpop.trf.xlu0
        %456 = vxpose.xlu0.b32.start [1/16] %v355, 128
        %457 = vxpose.xlu0.b32.cont [2/16] 0.0, 128
        %458 = vxpose.xlu0.b32.cont [3/16] 0.0, 128
        %459 = vxpose.xlu0.b32.cont [4/16] 0.0, 128
        %460 = vxpose.xlu0.b32.cont [5/16] 0.0, 128
        %461 = vxpose.xlu0.b32.cont [6/16] 0.0, 128
        %462 = vxpose.xlu0.b32.cont [7/16] 0.0, 128
        %463 = vxpose.xlu0.b32.cont [8/16] 0.0, 128
        %464 = vxpose.xlu0.b32.cont [9/16] 0.0, 128
        %465 = vxpose.xlu0.b32.cont [10/16] 0.0, 128
        %466 = vxpose.xlu0.b32.cont [11/16] 0.0, 128
        %467 = vxpose.xlu0.b32.cont [12/16] 0.0, 128
        %468 = vxpose.xlu0.b32.cont [13/16] 0.0, 128
        %469 = vxpose.xlu0.b32.cont [14/16] 0.0, 128
        %470 = vxpose.xlu0.b32.cont [15/16] 0.0, 128
        %471 = vxpose.xlu0.b32.end [16/16] 0.0, 128
        %v472 = vpop.trf.xlu0
        %v473 = vpop.trf.xlu0
        %v474 = vpop.trf.xlu0
        %v475 = vpop.trf.xlu0
        %v476 = vpop.trf.xlu0
        %v477 = vpop.trf.xlu0
        %v478 = vpop.trf.xlu0
        %v479 = vpop.trf.xlu0
        %v480 = vpop.trf.xlu0
        %v481 = vpop.trf.xlu0
        %v482 = vpop.trf.xlu0
        %v483 = vpop.trf.xlu0
        %v484 = vpop.trf.xlu0
        %v485 = vpop.trf.xlu0
        %v486 = vpop.trf.xlu0
        %v487 = vpop.trf.xlu0
        %vm488 = vcmask 64512
        %v489 = vsel %vm488, %v338, 0
        %491 = vmatprep.subr.mxu0 0.0
        %492 = vmatpush1.msra.mxu0 %v376
        %493 = vmatprep.subr.mxu0 0.0
        %494 = vmatpush1.msra.mxu0 0.0
        %495 = vmatprep.subr.mxu0 0.0
        %496 = vmatpush1.msra.mxu0 0.0
        %497 = vmatprep.subr.mxu0 0.0
        %498 = vmatpush1.msra.mxu0 0.0
        %499 = vmatprep.subr.mxu0 0.0
        %500 = vmatpush1.msra.mxu0 0.0
        %501 = vmatprep.subr.mxu0 0.0
        %502 = vmatpush1.msra.mxu0 0.0
        %503 = vmatprep.subr.mxu0 0.0
        %504 = vmatpush1.msra.mxu0 0.0
        %505 = vmatprep.subr.mxu0 0.0
        %506 = vmatpush1.msra.mxu0 0.0
        %507 = vmatprep.subr.mxu0 0.0
        %508 = vmatpush1.msra.mxu0 0.0
        %509 = vmatprep.subr.mxu0 0.0
        %510 = vmatpush1.msra.mxu0 0.0
        %511 = vmatprep.subr.mxu0 0.0
        %512 = vmatpush1.msra.mxu0 0.0
        %513 = vmatprep.subr.mxu0 0.0
        %514 = vmatpush1.msra.mxu0 0.0
        %515 = vmatprep.subr.mxu0 0.0
        %516 = vmatpush1.msra.mxu0 0.0
        %517 = vmatprep.subr.mxu0 0.0
        %518 = vmatpush1.msra.mxu0 0.0
        %519 = vmatprep.subr.mxu0 0.0
        %520 = vmatpush1.msra.mxu0 0.0
        %521 = vmatprep.subr.mxu0 0.0
        %522 = vmatpush1.msra.mxu0 0.0
        %523 = vmatprep.subr.mxu0 0.0
        %524 = vmatpush1.msra.mxu0 0.0
        %525 = vmatprep.subr.mxu0 0.0
        %526 = vmatpush1.msra.mxu0 0.0
        %527 = vmatprep.subr.mxu0 0.0
        %528 = vmatpush1.msra.mxu0 0.0
        %529 = vmatprep.subr.mxu0 0.0
        %530 = vmatpush1.msra.mxu0 0.0
        %531 = vmatprep.subr.mxu0 0.0
        %532 = vmatpush1.msra.mxu0 0.0
        %533 = vmatprep.subr.mxu0 0.0
        %534 = vmatpush1.msra.mxu0 0.0
        %535 = vmatprep.subr.mxu0 0.0
        %536 = vmatpush1.msra.mxu0 0.0
        %537 = vmatprep.subr.mxu0 0.0
        %538 = vmatpush1.msra.mxu0 0.0
        %539 = vmatprep.subr.mxu0 0.0
        %540 = vmatpush1.msra.mxu0 0.0
        %541 = vmatprep.subr.mxu0 0.0
        %542 = vmatpush1.msra.mxu0 0.0
        %543 = vmatprep.subr.mxu0 0.0
        %544 = vmatpush1.msra.mxu0 0.0
        %545 = vmatprep.subr.mxu0 0.0
        %546 = vmatpush1.msra.mxu0 0.0
        %547 = vmatprep.subr.mxu0 0.0
        %548 = vmatpush1.msra.mxu0 0.0
        %549 = vmatprep.subr.mxu0 0.0
        %550 = vmatpush1.msra.mxu0 0.0
        %551 = vmatprep.subr.mxu0 0.0
        %552 = vmatpush1.msra.mxu0 0.0
        %553 = vmatprep.subr.mxu0 0.0
        %554 = vmatpush1.msra.mxu0 0.0
        %555 = vmatprep.mubr.f32.mxu0 0.0
        %556 = vmatmul.mubr.f32.gmra.mrb[0].mxu0 %v489
        %v557 = vpop.f32.mrb[0].mxu0
        %v558 = vadd.f32 0.0, %v557
        %v559 = vpop.f32.mrb[0].mxu0
        %560 = vdwg.mxu0
        %v561 = vsel %vm488, %v343, 0
        %563 = vmatprep.subr.mxu0 0.0
        %564 = vmatpush1.msra.mxu0 %v408
        %565 = vmatprep.subr.mxu0 0.0
        %566 = vmatpush1.msra.mxu0 0.0
        %567 = vmatprep.subr.mxu0 0.0
        %568 = vmatpush1.msra.mxu0 0.0
        %569 = vmatprep.subr.mxu0 0.0
        %570 = vmatpush1.msra.mxu0 0.0
        %571 = vmatprep.subr.mxu0 0.0
        %572 = vmatpush1.msra.mxu0 0.0
        %573 = vmatprep.subr.mxu0 0.0
        %574 = vmatpush1.msra.mxu0 0.0
        %575 = vmatprep.subr.mxu0 0.0
        %576 = vmatpush1.msra.mxu0 0.0
        %577 = vmatprep.subr.mxu0 0.0
        %578 = vmatpush1.msra.mxu0 0.0
        %579 = vmatprep.subr.mxu0 0.0
        %580 = vmatpush1.msra.mxu0 0.0
        %581 = vmatprep.subr.mxu0 0.0
        %582 = vmatpush1.msra.mxu0 0.0
        %583 = vmatprep.subr.mxu0 0.0
        %584 = vmatpush1.msra.mxu0 0.0
        %585 = vmatprep.subr.mxu0 0.0
        %586 = vmatpush1.msra.mxu0 0.0
        %587 = vmatprep.subr.mxu0 0.0
        %588 = vmatpush1.msra.mxu0 0.0
        %589 = vmatprep.subr.mxu0 0.0
        %590 = vmatpush1.msra.mxu0 0.0
        %591 = vmatprep.subr.mxu0 0.0
        %592 = vmatpush1.msra.mxu0 0.0
        %593 = vmatprep.subr.mxu0 0.0
        %594 = vmatpush1.msra.mxu0 0.0
        %595 = vmatprep.subr.mxu0 0.0
        %596 = vmatpush1.msra.mxu0 0.0
        %597 = vmatprep.subr.mxu0 0.0
        %598 = vmatpush1.msra.mxu0 0.0
        %599 = vmatprep.subr.mxu0 0.0
        %600 = vmatpush1.msra.mxu0 0.0
        %601 = vmatprep.subr.mxu0 0.0
        %602 = vmatpush1.msra.mxu0 0.0
        %603 = vmatprep.subr.mxu0 0.0
        %604 = vmatpush1.msra.mxu0 0.0
        %605 = vmatprep.subr.mxu0 0.0
        %606 = vmatpush1.msra.mxu0 0.0
        %607 = vmatprep.subr.mxu0 0.0
        %608 = vmatpush1.msra.mxu0 0.0
        %609 = vmatprep.subr.mxu0 0.0
        %610 = vmatpush1.msra.mxu0 0.0
        %611 = vmatprep.subr.mxu0 0.0
        %612 = vmatpush1.msra.mxu0 0.0
        %613 = vmatprep.subr.mxu0 0.0
        %614 = vmatpush1.msra.mxu0 0.0
        %615 = vmatprep.subr.mxu0 0.0
        %616 = vmatpush1.msra.mxu0 0.0
        %617 = vmatprep.subr.mxu0 0.0
        %618 = vmatpush1.msra.mxu0 0.0
        %619 = vmatprep.subr.mxu0 0.0
        %620 = vmatpush1.msra.mxu0 0.0
        %621 = vmatprep.subr.mxu0 0.0
        %622 = vmatpush1.msra.mxu0 0.0
        %623 = vmatprep.subr.mxu0 0.0
        %624 = vmatpush1.msra.mxu0 0.0
        %625 = vmatprep.subr.mxu0 0.0
        %626 = vmatpush1.msra.mxu0 0.0
        %627 = vmatprep.mubr.f32.mxu0 0.0
        %628 = vmatmul.mubr.f32.gmra.mrb[0].mxu0 %v561
        %v629 = vpop.f32.mrb[0].mxu0
        %v630 = vadd.f32 0.0, %v629
        %v631 = vpop.f32.mrb[0].mxu0
        %632 = vdwg.mxu0
        %v633 = vsel %vm488, %v345, 0
        %635 = vmatprep.subr.mxu0 0.0
        %636 = vmatpush1.msra.mxu0 %v440
        %637 = vmatprep.subr.mxu0 0.0
        %638 = vmatpush1.msra.mxu0 0.0
        %639 = vmatprep.subr.mxu0 0.0
        %640 = vmatpush1.msra.mxu0 0.0
        %641 = vmatprep.subr.mxu0 0.0
        %642 = vmatpush1.msra.mxu0 0.0
        %643 = vmatprep.subr.mxu0 0.0
        %644 = vmatpush1.msra.mxu0 0.0
        %645 = vmatprep.subr.mxu0 0.0
        %646 = vmatpush1.msra.mxu0 0.0
        %647 = vmatprep.subr.mxu0 0.0
        %648 = vmatpush1.msra.mxu0 0.0
        %649 = vmatprep.subr.mxu0 0.0
        %650 = vmatpush1.msra.mxu0 0.0
        %651 = vmatprep.subr.mxu0 0.0
        %652 = vmatpush1.msra.mxu0 0.0
        %653 = vmatprep.subr.mxu0 0.0
        %654 = vmatpush1.msra.mxu0 0.0
        %655 = vmatprep.subr.mxu0 0.0
        %656 = vmatpush1.msra.mxu0 0.0
        %657 = vmatprep.subr.mxu0 0.0
        %658 = vmatpush1.msra.mxu0 0.0
        %659 = vmatprep.subr.mxu0 0.0
        %660 = vmatpush1.msra.mxu0 0.0
        %661 = vmatprep.subr.mxu0 0.0
        %662 = vmatpush1.msra.mxu0 0.0
        %663 = vmatprep.subr.mxu0 0.0
        %664 = vmatpush1.msra.mxu0 0.0
        %665 = vmatprep.subr.mxu0 0.0
        %666 = vmatpush1.msra.mxu0 0.0
        %667 = vmatprep.subr.mxu0 0.0
        %668 = vmatpush1.msra.mxu0 0.0
        %669 = vmatprep.subr.mxu0 0.0
        %670 = vmatpush1.msra.mxu0 0.0
        %671 = vmatprep.subr.mxu0 0.0
        %672 = vmatpush1.msra.mxu0 0.0
        %673 = vmatprep.subr.mxu0 0.0
        %674 = vmatpush1.msra.mxu0 0.0
        %675 = vmatprep.subr.mxu0 0.0
        %676 = vmatpush1.msra.mxu0 0.0
        %677 = vmatprep.subr.mxu0 0.0
        %678 = vmatpush1.msra.mxu0 0.0
        %679 = vmatprep.subr.mxu0 0.0
        %680 = vmatpush1.msra.mxu0 0.0
        %681 = vmatprep.subr.mxu0 0.0
        %682 = vmatpush1.msra.mxu0 0.0
        %683 = vmatprep.subr.mxu0 0.0
        %684 = vmatpush1.msra.mxu0 0.0
        %685 = vmatprep.subr.mxu0 0.0
        %686 = vmatpush1.msra.mxu0 0.0
        %687 = vmatprep.subr.mxu0 0.0
        %688 = vmatpush1.msra.mxu0 0.0
        %689 = vmatprep.subr.mxu0 0.0
        %690 = vmatpush1.msra.mxu0 0.0
        %691 = vmatprep.subr.mxu0 0.0
        %692 = vmatpush1.msra.mxu0 0.0
        %693 = vmatprep.subr.mxu0 0.0
        %694 = vmatpush1.msra.mxu0 0.0
        %695 = vmatprep.subr.mxu0 0.0
        %696 = vmatpush1.msra.mxu0 0.0
        %697 = vmatprep.subr.mxu0 0.0
        %698 = vmatpush1.msra.mxu0 0.0
        %699 = vmatprep.mubr.f32.mxu0 0.0
        %700 = vmatmul.mubr.f32.gmra.mrb[0].mxu0 %v633
        %v701 = vpop.f32.mrb[0].mxu0
        %v702 = vadd.f32 0.0, %v701
        %v703 = vpop.f32.mrb[0].mxu0
        %704 = vdwg.mxu0
        %v705 = vsel %vm488, %v347, 0
        %707 = vmatprep.subr.mxu0 0.0
        %708 = vmatpush1.msra.mxu0 %v472
        %709 = vmatprep.subr.mxu0 0.0
        %710 = vmatpush1.msra.mxu0 0.0
        %711 = vmatprep.subr.mxu0 0.0
        %712 = vmatpush1.msra.mxu0 0.0
        %713 = vmatprep.subr.mxu0 0.0
        %714 = vmatpush1.msra.mxu0 0.0
        %715 = vmatprep.subr.mxu0 0.0
        %716 = vmatpush1.msra.mxu0 0.0
        %717 = vmatprep.subr.mxu0 0.0
        %718 = vmatpush1.msra.mxu0 0.0
        %719 = vmatprep.subr.mxu0 0.0
        %720 = vmatpush1.msra.mxu0 0.0
        %721 = vmatprep.subr.mxu0 0.0
        %722 = vmatpush1.msra.mxu0 0.0
        %723 = vmatprep.subr.mxu0 0.0
        %724 = vmatpush1.msra.mxu0 0.0
        %725 = vmatprep.subr.mxu0 0.0
        %726 = vmatpush1.msra.mxu0 0.0
        %727 = vmatprep.subr.mxu0 0.0
        %728 = vmatpush1.msra.mxu0 0.0
        %729 = vmatprep.subr.mxu0 0.0
        %730 = vmatpush1.msra.mxu0 0.0
        %731 = vmatprep.subr.mxu0 0.0
        %732 = vmatpush1.msra.mxu0 0.0
        %733 = vmatprep.subr.mxu0 0.0
        %734 = vmatpush1.msra.mxu0 0.0
        %735 = vmatprep.subr.mxu0 0.0
        %736 = vmatpush1.msra.mxu0 0.0
        %737 = vmatprep.subr.mxu0 0.0
        %738 = vmatpush1.msra.mxu0 0.0
        %739 = vmatprep.subr.mxu0 0.0
        %740 = vmatpush1.msra.mxu0 0.0
        %741 = vmatprep.subr.mxu0 0.0
        %742 = vmatpush1.msra.mxu0 0.0
        %743 = vmatprep.subr.mxu0 0.0
        %744 = vmatpush1.msra.mxu0 0.0
        %745 = vmatprep.subr.mxu0 0.0
        %746 = vmatpush1.msra.mxu0 0.0
        %747 = vmatprep.subr.mxu0 0.0
        %748 = vmatpush1.msra.mxu0 0.0
        %749 = vmatprep.subr.mxu0 0.0
        %750 = vmatpush1.msra.mxu0 0.0
        %751 = vmatprep.subr.mxu0 0.0
        %752 = vmatpush1.msra.mxu0 0.0
        %753 = vmatprep.subr.mxu0 0.0
        %754 = vmatpush1.msra.mxu0 0.0
        %755 = vmatprep.subr.mxu0 0.0
        %756 = vmatpush1.msra.mxu0 0.0
        %757 = vmatprep.subr.mxu0 0.0
        %758 = vmatpush1.msra.mxu0 0.0
        %759 = vmatprep.subr.mxu0 0.0
        %760 = vmatpush1.msra.mxu0 0.0
        %761 = vmatprep.subr.mxu0 0.0
        %762 = vmatpush1.msra.mxu0 0.0
        %763 = vmatprep.subr.mxu0 0.0
        %764 = vmatpush1.msra.mxu0 0.0
        %765 = vmatprep.subr.mxu0 0.0
        %766 = vmatpush1.msra.mxu0 0.0
        %767 = vmatprep.subr.mxu0 0.0
        %768 = vmatpush1.msra.mxu0 0.0
        %769 = vmatprep.subr.mxu0 0.0
        %770 = vmatpush1.msra.mxu0 0.0
        %771 = vmatprep.mubr.f32.mxu0 0.0
        %772 = vmatmul.mubr.f32.gmra.mrb[0].mxu0 %v705
        %v773 = vpop.f32.mrb[0].mxu0
        %v774 = vadd.f32 0.0, %v773
        %v775 = vpop.f32.mrb[0].mxu0
        %776 = vdwg.mxu0
        %v777 = vmul.f32 %v558, 0.17677669
        %v778 = vmul.f32 %v630, 0.17677669
        %v779 = vmul.f32 %v702, 0.17677669
        %v780 = vmul.f32 %v774, 0.17677669
        %v781 = vsel %vm488, %v777, -inf
        %782 = vmax.xlane.f32.xlu0 %v781
        %v783 = vpop.xlane.xlu0 %782
        %v784 = vsel %vm488, %v778, -inf
        %785 = vmax.xlane.f32.xlu0 %v784
        %v786 = vpop.xlane.xlu0 %785
        %v787 = vsel %vm488, %v779, -inf
        %788 = vmax.xlane.f32.xlu0 %v787
        %v789 = vpop.xlane.xlu0 %788
        %v790 = vsel %vm488, %v780, -inf
        %791 = vmax.xlane.f32.xlu0 %v790
        %v792 = vpop.xlane.xlu0 %791
        %v793 = vsub.f32 %v777, %v783
        %v794 = vsub.f32 %v778, %v786
        %v795 = vsub.f32 %v779, %v789
        %v796 = vsub.f32 %v780, %v792
        %v797 = vmul.f32 %v793, 1.442695
        %v798 = vpow.pop %v797
        %v799 = vmul.f32 %v794, 1.442695
        %v800 = vpow.pop %v799
        %v801 = vmul.f32 %v795, 1.442695
        %v802 = vpow.pop %v801
        %v803 = vmul.f32 %v796, 1.442695
        %v804 = vpow.pop %v803
        %v805 = vsel %vm488, %v798, 0.0
        %806 = vadd.xlane.f32.xlu0 %v805
        %v807 = vpop.xlane.xlu0 %806
        %v808 = vsel %vm488, %v800, 0.0
        %809 = vadd.xlane.f32.xlu0 %v808
        %v810 = vpop.xlane.xlu0 %809
        %v811 = vsel %vm488, %v802, 0.0
        %812 = vadd.xlane.f32.xlu0 %v811
        %v813 = vpop.xlane.xlu0 %812
        %v814 = vsel %vm488, %v804, 0.0
        %815 = vadd.xlane.f32.xlu0 %v814
        %v816 = vpop.xlane.xlu0 %815
        %v817 = vrcp.pop %v807
        %v818 = vmul.f32 %v798, %v817
        %v819 = vrcp.pop %v810
        %v820 = vmul.f32 %v800, %v819
        %v821 = vrcp.pop %v813
        %v822 = vmul.f32 %v802, %v821
        %v823 = vrcp.pop %v816
        %v824 = vmul.f32 %v804, %v823
        %825 = vrot.lane.b32.xlu0 %v338, 64
        %v826 = vpop.permute.xlu0 %825
        %827 = vrot.lane.b32.xlu0 %v343, 64
        %v828 = vpop.permute.xlu0 %827
        %829 = vrot.lane.b32.xlu0 %v345, 64
        %v830 = vpop.permute.xlu0 %829
        %831 = vrot.lane.b32.xlu0 %v347, 64
        %v832 = vpop.permute.xlu0 %831
        %837 = vxpose.xlu0.b32.start [1/16] %v826, 128
        %838 = vxpose.xlu0.b32.cont [2/16] 0.0, 128
        %839 = vxpose.xlu0.b32.cont [3/16] 0.0, 128
        %840 = vxpose.xlu0.b32.cont [4/16] 0.0, 128
        %841 = vxpose.xlu0.b32.cont [5/16] 0.0, 128
        %842 = vxpose.xlu0.b32.cont [6/16] 0.0, 128
        %843 = vxpose.xlu0.b32.cont [7/16] 0.0, 128
        %844 = vxpose.xlu0.b32.cont [8/16] 0.0, 128
        %845 = vxpose.xlu0.b32.cont [9/16] 0.0, 128
        %846 = vxpose.xlu0.b32.cont [10/16] 0.0, 128
        %847 = vxpose.xlu0.b32.cont [11/16] 0.0, 128
        %848 = vxpose.xlu0.b32.cont [12/16] 0.0, 128
        %849 = vxpose.xlu0.b32.cont [13/16] 0.0, 128
        %850 = vxpose.xlu0.b32.cont [14/16] 0.0, 128
        %851 = vxpose.xlu0.b32.cont [15/16] 0.0, 128
        %852 = vxpose.xlu0.b32.end [16/16] 0.0, 128
        %v853 = vpop.trf.xlu0
        %v854 = vpop.trf.xlu0
        %v855 = vpop.trf.xlu0
        %v856 = vpop.trf.xlu0
        %v857 = vpop.trf.xlu0
        %v858 = vpop.trf.xlu0
        %v859 = vpop.trf.xlu0
        %v860 = vpop.trf.xlu0
        %v861 = vpop.trf.xlu0
        %v862 = vpop.trf.xlu0
        %v863 = vpop.trf.xlu0
        %v864 = vpop.trf.xlu0
        %v865 = vpop.trf.xlu0
        %v866 = vpop.trf.xlu0
        %v867 = vpop.trf.xlu0
        %v868 = vpop.trf.xlu0
        %869 = vxpose.xlu0.b32.start [1/16] %v828, 128
        %870 = vxpose.xlu0.b32.cont [2/16] 0.0, 128
        %871 = vxpose.xlu0.b32.cont [3/16] 0.0, 128
        %872 = vxpose.xlu0.b32.cont [4/16] 0.0, 128
        %873 = vxpose.xlu0.b32.cont [5/16] 0.0, 128
        %874 = vxpose.xlu0.b32.cont [6/16] 0.0, 128
        %875 = vxpose.xlu0.b32.cont [7/16] 0.0, 128
        %876 = vxpose.xlu0.b32.cont [8/16] 0.0, 128
        %877 = vxpose.xlu0.b32.cont [9/16] 0.0, 128
        %878 = vxpose.xlu0.b32.cont [10/16] 0.0, 128
        %879 = vxpose.xlu0.b32.cont [11/16] 0.0, 128
        %880 = vxpose.xlu0.b32.cont [12/16] 0.0, 128
        %881 = vxpose.xlu0.b32.cont [13/16] 0.0, 128
        %882 = vxpose.xlu0.b32.cont [14/16] 0.0, 128
        %883 = vxpose.xlu0.b32.cont [15/16] 0.0, 128
        %884 = vxpose.xlu0.b32.end [16/16] 0.0, 128
        %v885 = vpop.trf.xlu0
        %v886 = vpop.trf.xlu0
        %v887 = vpop.trf.xlu0
        %v888 = vpop.trf.xlu0
        %v889 = vpop.trf.xlu0
        %v890 = vpop.trf.xlu0
        %v891 = vpop.trf.xlu0
        %v892 = vpop.trf.xlu0
        %v893 = vpop.trf.xlu0
        %v894 = vpop.trf.xlu0
        %v895 = vpop.trf.xlu0
        %v896 = vpop.trf.xlu0
        %v897 = vpop.trf.xlu0
        %v898 = vpop.trf.xlu0
        %v899 = vpop.trf.xlu0
        %v900 = vpop.trf.xlu0
        %901 = vxpose.xlu0.b32.start [1/16] %v830, 128
        %902 = vxpose.xlu0.b32.cont [2/16] 0.0, 128
        %903 = vxpose.xlu0.b32.cont [3/16] 0.0, 128
        %904 = vxpose.xlu0.b32.cont [4/16] 0.0, 128
        %905 = vxpose.xlu0.b32.cont [5/16] 0.0, 128
        %906 = vxpose.xlu0.b32.cont [6/16] 0.0, 128
        %907 = vxpose.xlu0.b32.cont [7/16] 0.0, 128
        %908 = vxpose.xlu0.b32.cont [8/16] 0.0, 128
        %909 = vxpose.xlu0.b32.cont [9/16] 0.0, 128
        %910 = vxpose.xlu0.b32.cont [10/16] 0.0, 128
        %911 = vxpose.xlu0.b32.cont [11/16] 0.0, 128
        %912 = vxpose.xlu0.b32.cont [12/16] 0.0, 128
        %913 = vxpose.xlu0.b32.cont [13/16] 0.0, 128
        %914 = vxpose.xlu0.b32.cont [14/16] 0.0, 128
        %915 = vxpose.xlu0.b32.cont [15/16] 0.0, 128
        %916 = vxpose.xlu0.b32.end [16/16] 0.0, 128
        %v917 = vpop.trf.xlu0
        %v918 = vpop.trf.xlu0
        %v919 = vpop.trf.xlu0
        %v920 = vpop.trf.xlu0
        %v921 = vpop.trf.xlu0
        %v922 = vpop.trf.xlu0
        %v923 = vpop.trf.xlu0
        %v924 = vpop.trf.xlu0
        %v925 = vpop.trf.xlu0
        %v926 = vpop.trf.xlu0
        %v927 = vpop.trf.xlu0
        %v928 = vpop.trf.xlu0
        %v929 = vpop.trf.xlu0
        %v930 = vpop.trf.xlu0
        %v931 = vpop.trf.xlu0
        %v932 = vpop.trf.xlu0
        %933 = vxpose.xlu0.b32.start [1/16] %v832, 128
        %934 = vxpose.xlu0.b32.cont [2/16] 0.0, 128
        %935 = vxpose.xlu0.b32.cont [3/16] 0.0, 128
        %936 = vxpose.xlu0.b32.cont [4/16] 0.0, 128
        %937 = vxpose.xlu0.b32.cont [5/16] 0.0, 128
        %938 = vxpose.xlu0.b32.cont [6/16] 0.0, 128
        %939 = vxpose.xlu0.b32.cont [7/16] 0.0, 128
        %940 = vxpose.xlu0.b32.cont [8/16] 0.0, 128
        %941 = vxpose.xlu0.b32.cont [9/16] 0.0, 128
        %942 = vxpose.xlu0.b32.cont [10/16] 0.0, 128
        %943 = vxpose.xlu0.b32.cont [11/16] 0.0, 128
        %944 = vxpose.xlu0.b32.cont [12/16] 0.0, 128
        %945 = vxpose.xlu0.b32.cont [13/16] 0.0, 128
        %946 = vxpose.xlu0.b32.cont [14/16] 0.0, 128
        %947 = vxpose.xlu0.b32.cont [15/16] 0.0, 128
        %948 = vxpose.xlu0.b32.end [16/16] 0.0, 128
        %v949 = vpop.trf.xlu0
        %v950 = vpop.trf.xlu0
        %v951 = vpop.trf.xlu0
        %v952 = vpop.trf.xlu0
        %v953 = vpop.trf.xlu0
        %v954 = vpop.trf.xlu0
        %v955 = vpop.trf.xlu0
        %v956 = vpop.trf.xlu0
        %v957 = vpop.trf.xlu0
        %v958 = vpop.trf.xlu0
        %v959 = vpop.trf.xlu0
        %v960 = vpop.trf.xlu0
        %v961 = vpop.trf.xlu0
        %v962 = vpop.trf.xlu0
        %v963 = vpop.trf.xlu0
        %v964 = vpop.trf.xlu0
        %v966 = vsel %vm488, %v853, 0
        %v969 = vsel %vm488, %v818, 0
        %971 = vmatprep.subr.mxu0 0.0
        %972 = vmatpush1.xpose.msra.mxu0 %v969
        %973 = vmatprep.subr.mxu0 0.0
        %974 = vmatpush1.xpose.msra.mxu0 0.0
        %975 = vmatprep.subr.mxu0 0.0
        %976 = vmatpush1.xpose.msra.mxu0 0.0
        %977 = vmatprep.subr.mxu0 0.0
        %978 = vmatpush1.xpose.msra.mxu0 0.0
        %979 = vmatprep.subr.mxu0 0.0
        %980 = vmatpush1.xpose.msra.mxu0 0.0
        %981 = vmatprep.subr.mxu0 0.0
        %982 = vmatpush1.xpose.msra.mxu0 0.0
        %983 = vmatprep.subr.mxu0 0.0
        %984 = vmatpush1.xpose.msra.mxu0 0.0
        %985 = vmatprep.subr.mxu0 0.0
        %986 = vmatpush1.xpose.msra.mxu0 0.0
        %987 = vmatprep.subr.mxu0 0.0
        %988 = vmatpush1.xpose.msra.mxu0 0.0
        %989 = vmatprep.subr.mxu0 0.0
        %990 = vmatpush1.xpose.msra.mxu0 0.0
        %991 = vmatprep.subr.mxu0 0.0
        %992 = vmatpush1.xpose.msra.mxu0 0.0
        %993 = vmatprep.subr.mxu0 0.0
        %994 = vmatpush1.xpose.msra.mxu0 0.0
        %995 = vmatprep.subr.mxu0 0.0
        %996 = vmatpush1.xpose.msra.mxu0 0.0
        %997 = vmatprep.subr.mxu0 0.0
        %998 = vmatpush1.xpose.msra.mxu0 0.0
        %999 = vmatprep.subr.mxu0 0.0
        %1000 = vmatpush1.xpose.msra.mxu0 0.0
        %1001 = vmatprep.subr.mxu0 0.0
        %1002 = vmatpush1.xpose.msra.mxu0 0.0
        %1003 = vmatprep.subr.mxu0 0.0
        %1004 = vmatpush1.xpose.msra.mxu0 0.0
        %1005 = vmatprep.subr.mxu0 0.0
        %1006 = vmatpush1.xpose.msra.mxu0 0.0
        %1007 = vmatprep.subr.mxu0 0.0
        %1008 = vmatpush1.xpose.msra.mxu0 0.0
        %1009 = vmatprep.subr.mxu0 0.0
        %1010 = vmatpush1.xpose.msra.mxu0 0.0
        %1011 = vmatprep.subr.mxu0 0.0
        %1012 = vmatpush1.xpose.msra.mxu0 0.0
        %1013 = vmatprep.subr.mxu0 0.0
        %1014 = vmatpush1.xpose.msra.mxu0 0.0
        %1015 = vmatprep.subr.mxu0 0.0
        %1016 = vmatpush1.xpose.msra.mxu0 0.0
        %1017 = vmatprep.subr.mxu0 0.0
        %1018 = vmatpush1.xpose.msra.mxu0 0.0
        %1019 = vmatprep.subr.mxu0 0.0
        %1020 = vmatpush1.xpose.msra.mxu0 0.0
        %1021 = vmatprep.subr.mxu0 0.0
        %1022 = vmatpush1.xpose.msra.mxu0 0.0
        %1023 = vmatprep.subr.mxu0 0.0
        %1024 = vmatpush1.xpose.msra.mxu0 0.0
        %1025 = vmatprep.subr.mxu0 0.0
        %1026 = vmatpush1.xpose.msra.mxu0 0.0
        %1027 = vmatprep.subr.mxu0 0.0
        %1028 = vmatpush1.xpose.msra.mxu0 0.0
        %1029 = vmatprep.subr.mxu0 0.0
        %1030 = vmatpush1.xpose.msra.mxu0 0.0
        %1031 = vmatprep.subr.mxu0 0.0
        %1032 = vmatpush1.xpose.msra.mxu0 0.0
        %1033 = vmatprep.subr.mxu0 0.0
        %1034 = vmatpush1.xpose.msra.mxu0 0.0
        %1035 = vmatprep.mubr.f32.mxu0 0.0
        %1036 = vmatmul.mubr.f32.gmra.mrb[0].mxu0 %v966
        %v1037 = vpop.f32.mrb[0].mxu0
        %v1038 = vadd.f32 0.0, %v1037
        %v1039 = vpop.f32.mrb[0].mxu0
        %1040 = vdwg.mxu0
        %v1042 = vsel %vm488, %v885, 0
        %v1045 = vsel %vm488, %v820, 0
        %1047 = vmatprep.subr.mxu0 0.0
        %1048 = vmatpush1.xpose.msra.mxu0 %v1045
        %1049 = vmatprep.subr.mxu0 0.0
        %1050 = vmatpush1.xpose.msra.mxu0 0.0
        %1051 = vmatprep.subr.mxu0 0.0
        %1052 = vmatpush1.xpose.msra.mxu0 0.0
        %1053 = vmatprep.subr.mxu0 0.0
        %1054 = vmatpush1.xpose.msra.mxu0 0.0
        %1055 = vmatprep.subr.mxu0 0.0
        %1056 = vmatpush1.xpose.msra.mxu0 0.0
        %1057 = vmatprep.subr.mxu0 0.0
        %1058 = vmatpush1.xpose.msra.mxu0 0.0
        %1059 = vmatprep.subr.mxu0 0.0
        %1060 = vmatpush1.xpose.msra.mxu0 0.0
        %1061 = vmatprep.subr.mxu0 0.0
        %1062 = vmatpush1.xpose.msra.mxu0 0.0
        %1063 = vmatprep.subr.mxu0 0.0
        %1064 = vmatpush1.xpose.msra.mxu0 0.0
        %1065 = vmatprep.subr.mxu0 0.0
        %1066 = vmatpush1.xpose.msra.mxu0 0.0
        %1067 = vmatprep.subr.mxu0 0.0
        %1068 = vmatpush1.xpose.msra.mxu0 0.0
        %1069 = vmatprep.subr.mxu0 0.0
        %1070 = vmatpush1.xpose.msra.mxu0 0.0
        %1071 = vmatprep.subr.mxu0 0.0
        %1072 = vmatpush1.xpose.msra.mxu0 0.0
        %1073 = vmatprep.subr.mxu0 0.0
        %1074 = vmatpush1.xpose.msra.mxu0 0.0
        %1075 = vmatprep.subr.mxu0 0.0
        %1076 = vmatpush1.xpose.msra.mxu0 0.0
        %1077 = vmatprep.subr.mxu0 0.0
        %1078 = vmatpush1.xpose.msra.mxu0 0.0
        %1079 = vmatprep.subr.mxu0 0.0
        %1080 = vmatpush1.xpose.msra.mxu0 0.0
        %1081 = vmatprep.subr.mxu0 0.0
        %1082 = vmatpush1.xpose.msra.mxu0 0.0
        %1083 = vmatprep.subr.mxu0 0.0
        %1084 = vmatpush1.xpose.msra.mxu0 0.0
        %1085 = vmatprep.subr.mxu0 0.0
        %1086 = vmatpush1.xpose.msra.mxu0 0.0
        %1087 = vmatprep.subr.mxu0 0.0
        %1088 = vmatpush1.xpose.msra.mxu0 0.0
        %1089 = vmatprep.subr.mxu0 0.0
        %1090 = vmatpush1.xpose.msra.mxu0 0.0
        %1091 = vmatprep.subr.mxu0 0.0
        %1092 = vmatpush1.xpose.msra.mxu0 0.0
        %1093 = vmatprep.subr.mxu0 0.0
        %1094 = vmatpush1.xpose.msra.mxu0 0.0
        %1095 = vmatprep.subr.mxu0 0.0
        %1096 = vmatpush1.xpose.msra.mxu0 0.0
        %1097 = vmatprep.subr.mxu0 0.0
        %1098 = vmatpush1.xpose.msra.mxu0 0.0
        %1099 = vmatprep.subr.mxu0 0.0
        %1100 = vmatpush1.xpose.msra.mxu0 0.0
        %1101 = vmatprep.subr.mxu0 0.0
        %1102 = vmatpush1.xpose.msra.mxu0 0.0
        %1103 = vmatprep.subr.mxu0 0.0
        %1104 = vmatpush1.xpose.msra.mxu0 0.0
        %1105 = vmatprep.subr.mxu0 0.0
        %1106 = vmatpush1.xpose.msra.mxu0 0.0
        %1107 = vmatprep.subr.mxu0 0.0
        %1108 = vmatpush1.xpose.msra.mxu0 0.0
        %1109 = vmatprep.subr.mxu0 0.0
        %1110 = vmatpush1.xpose.msra.mxu0 0.0
        %1111 = vmatprep.mubr.f32.mxu0 0.0
        %1112 = vmatmul.mubr.f32.gmra.mrb[0].mxu0 %v1042
        %v1113 = vpop.f32.mrb[0].mxu0
        %v1114 = vadd.f32 0.0, %v1113
        %v1115 = vpop.f32.mrb[0].mxu0
        %1116 = vdwg.mxu0
        %v1118 = vsel %vm488, %v917, 0
        %v1121 = vsel %vm488, %v822, 0
        %1123 = vmatprep.subr.mxu0 0.0
        %1124 = vmatpush1.xpose.msra.mxu0 %v1121
        %1125 = vmatprep.subr.mxu0 0.0
        %1126 = vmatpush1.xpose.msra.mxu0 0.0
        %1127 = vmatprep.subr.mxu0 0.0
        %1128 = vmatpush1.xpose.msra.mxu0 0.0
        %1129 = vmatprep.subr.mxu0 0.0
        %1130 = vmatpush1.xpose.msra.mxu0 0.0
        %1131 = vmatprep.subr.mxu0 0.0
        %1132 = vmatpush1.xpose.msra.mxu0 0.0
        %1133 = vmatprep.subr.mxu0 0.0
        %1134 = vmatpush1.xpose.msra.mxu0 0.0
        %1135 = vmatprep.subr.mxu0 0.0
        %1136 = vmatpush1.xpose.msra.mxu0 0.0
        %1137 = vmatprep.subr.mxu0 0.0
        %1138 = vmatpush1.xpose.msra.mxu0 0.0
        %1139 = vmatprep.subr.mxu0 0.0
        %1140 = vmatpush1.xpose.msra.mxu0 0.0
        %1141 = vmatprep.subr.mxu0 0.0
        %1142 = vmatpush1.xpose.msra.mxu0 0.0
        %1143 = vmatprep.subr.mxu0 0.0
        %1144 = vmatpush1.xpose.msra.mxu0 0.0
        %1145 = vmatprep.subr.mxu0 0.0
        %1146 = vmatpush1.xpose.msra.mxu0 0.0
        %1147 = vmatprep.subr.mxu0 0.0
        %1148 = vmatpush1.xpose.msra.mxu0 0.0
        %1149 = vmatprep.subr.mxu0 0.0
        %1150 = vmatpush1.xpose.msra.mxu0 0.0
        %1151 = vmatprep.subr.mxu0 0.0
        %1152 = vmatpush1.xpose.msra.mxu0 0.0
        %1153 = vmatprep.subr.mxu0 0.0
        %1154 = vmatpush1.xpose.msra.mxu0 0.0
        %1155 = vmatprep.subr.mxu0 0.0
        %1156 = vmatpush1.xpose.msra.mxu0 0.0
        %1157 = vmatprep.subr.mxu0 0.0
        %1158 = vmatpush1.xpose.msra.mxu0 0.0
        %1159 = vmatprep.subr.mxu0 0.0
        %1160 = vmatpush1.xpose.msra.mxu0 0.0
        %1161 = vmatprep.subr.mxu0 0.0
        %1162 = vmatpush1.xpose.msra.mxu0 0.0
        %1163 = vmatprep.subr.mxu0 0.0
        %1164 = vmatpush1.xpose.msra.mxu0 0.0
        %1165 = vmatprep.subr.mxu0 0.0
        %1166 = vmatpush1.xpose.msra.mxu0 0.0
        %1167 = vmatprep.subr.mxu0 0.0
        %1168 = vmatpush1.xpose.msra.mxu0 0.0
        %1169 = vmatprep.subr.mxu0 0.0
        %1170 = vmatpush1.xpose.msra.mxu0 0.0
        %1171 = vmatprep.subr.mxu0 0.0
        %1172 = vmatpush1.xpose.msra.mxu0 0.0
        %1173 = vmatprep.subr.mxu0 0.0
        %1174 = vmatpush1.xpose.msra.mxu0 0.0
        %1175 = vmatprep.subr.mxu0 0.0
        %1176 = vmatpush1.xpose.msra.mxu0 0.0
        %1177 = vmatprep.subr.mxu0 0.0
        %1178 = vmatpush1.xpose.msra.mxu0 0.0
        %1179 = vmatprep.subr.mxu0 0.0
        %1180 = vmatpush1.xpose.msra.mxu0 0.0
        %1181 = vmatprep.subr.mxu0 0.0
        %1182 = vmatpush1.xpose.msra.mxu0 0.0
        %1183 = vmatprep.subr.mxu0 0.0
        %1184 = vmatpush1.xpose.msra.mxu0 0.0
        %1185 = vmatprep.subr.mxu0 0.0
        %1186 = vmatpush1.xpose.msra.mxu0 0.0
        %1187 = vmatprep.mubr.f32.mxu0 0.0
        %1188 = vmatmul.mubr.f32.gmra.mrb[0].mxu0 %v1118
        %v1189 = vpop.f32.mrb[0].mxu0
        %v1190 = vadd.f32 0.0, %v1189
        %v1191 = vpop.f32.mrb[0].mxu0
        %1192 = vdwg.mxu0
        %v1194 = vsel %vm488, %v949, 0
        %v1197 = vsel %vm488, %v824, 0
        %1199 = vmatprep.subr.mxu0 0.0
        %1200 = vmatpush1.xpose.msra.mxu0 %v1197
        %1201 = vmatprep.subr.mxu0 0.0
        %1202 = vmatpush1.xpose.msra.mxu0 0.0
        %1203 = vmatprep.subr.mxu0 0.0
        %1204 = vmatpush1.xpose.msra.mxu0 0.0
        %1205 = vmatprep.subr.mxu0 0.0
        %1206 = vmatpush1.xpose.msra.mxu0 0.0
        %1207 = vmatprep.subr.mxu0 0.0
        %1208 = vmatpush1.xpose.msra.mxu0 0.0
        %1209 = vmatprep.subr.mxu0 0.0
        %1210 = vmatpush1.xpose.msra.mxu0 0.0
        %1211 = vmatprep.subr.mxu0 0.0
        %1212 = vmatpush1.xpose.msra.mxu0 0.0
        %1213 = vmatprep.subr.mxu0 0.0
        %1214 = vmatpush1.xpose.msra.mxu0 0.0
        %1215 = vmatprep.subr.mxu0 0.0
        %1216 = vmatpush1.xpose.msra.mxu0 0.0
        %1217 = vmatprep.subr.mxu0 0.0
        %1218 = vmatpush1.xpose.msra.mxu0 0.0
        %1219 = vmatprep.subr.mxu0 0.0
        %1220 = vmatpush1.xpose.msra.mxu0 0.0
        %1221 = vmatprep.subr.mxu0 0.0
        %1222 = vmatpush1.xpose.msra.mxu0 0.0
        %1223 = vmatprep.subr.mxu0 0.0
        %1224 = vmatpush1.xpose.msra.mxu0 0.0
        %1225 = vmatprep.subr.mxu0 0.0
        %1226 = vmatpush1.xpose.msra.mxu0 0.0
        %1227 = vmatprep.subr.mxu0 0.0
        %1228 = vmatpush1.xpose.msra.mxu0 0.0
        %1229 = vmatprep.subr.mxu0 0.0
        %1230 = vmatpush1.xpose.msra.mxu0 0.0
        %1231 = vmatprep.subr.mxu0 0.0
        %1232 = vmatpush1.xpose.msra.mxu0 0.0
        %1233 = vmatprep.subr.mxu0 0.0
        %1234 = vmatpush1.xpose.msra.mxu0 0.0
        %1235 = vmatprep.subr.mxu0 0.0
        %1236 = vmatpush1.xpose.msra.mxu0 0.0
        %1237 = vmatprep.subr.mxu0 0.0
        %1238 = vmatpush1.xpose.msra.mxu0 0.0
        %1239 = vmatprep.subr.mxu0 0.0
        %1240 = vmatpush1.xpose.msra.mxu0 0.0
        %1241 = vmatprep.subr.mxu0 0.0
        %1242 = vmatpush1.xpose.msra.mxu0 0.0
        %1243 = vmatprep.subr.mxu0 0.0
        %1244 = vmatpush1.xpose.msra.mxu0 0.0
        %1245 = vmatprep.subr.mxu0 0.0
        %1246 = vmatpush1.xpose.msra.mxu0 0.0
        %1247 = vmatprep.subr.mxu0 0.0
        %1248 = vmatpush1.xpose.msra.mxu0 0.0
        %1249 = vmatprep.subr.mxu0 0.0
        %1250 = vmatpush1.xpose.msra.mxu0 0.0
        %1251 = vmatprep.subr.mxu0 0.0
        %1252 = vmatpush1.xpose.msra.mxu0 0.0
        %1253 = vmatprep.subr.mxu0 0.0
        %1254 = vmatpush1.xpose.msra.mxu0 0.0
        %1255 = vmatprep.subr.mxu0 0.0
        %1256 = vmatpush1.xpose.msra.mxu0 0.0
        %1257 = vmatprep.subr.mxu0 0.0
        %1258 = vmatpush1.xpose.msra.mxu0 0.0
        %1259 = vmatprep.subr.mxu0 0.0
        %1260 = vmatpush1.xpose.msra.mxu0 0.0
        %1261 = vmatprep.subr.mxu0 0.0
        %1262 = vmatpush1.xpose.msra.mxu0 0.0
        %1263 = vmatprep.mubr.f32.mxu0 0.0
        %1264 = vmatmul.mubr.f32.gmra.mrb[0].mxu0 %v1194
        %v1265 = vpop.f32.mrb[0].mxu0
        %v1266 = vadd.f32 0.0, %v1265
        %v1267 = vpop.f32.mrb[0].mxu0
        %1268 = vdwg.mxu0
        %1269 = vxpose.xlu0.b32.start [1/16] %v1038, 128
        %1270 = vxpose.xlu0.b32.cont [2/16] 0.0, 128
        %1271 = vxpose.xlu0.b32.cont [3/16] 0.0, 128
        %1272 = vxpose.xlu0.b32.cont [4/16] 0.0, 128
        %1273 = vxpose.xlu0.b32.cont [5/16] 0.0, 128
        %1274 = vxpose.xlu0.b32.cont [6/16] 0.0, 128
        %1275 = vxpose.xlu0.b32.cont [7/16] 0.0, 128
        %1276 = vxpose.xlu0.b32.cont [8/16] 0.0, 128
        %1277 = vxpose.xlu0.b32.cont [9/16] 0.0, 128
        %1278 = vxpose.xlu0.b32.cont [10/16] 0.0, 128
        %1279 = vxpose.xlu0.b32.cont [11/16] 0.0, 128
        %1280 = vxpose.xlu0.b32.cont [12/16] 0.0, 128
        %1281 = vxpose.xlu0.b32.cont [13/16] 0.0, 128
        %1282 = vxpose.xlu0.b32.cont [14/16] 0.0, 128
        %1283 = vxpose.xlu0.b32.cont [15/16] 0.0, 128
        %1284 = vxpose.xlu0.b32.end [16/16] 0.0, 128
        %v1285 = vpop.trf.xlu0
        %v1286 = vpop.trf.xlu0
        %v1287 = vpop.trf.xlu0
        %v1288 = vpop.trf.xlu0
        %v1289 = vpop.trf.xlu0
        %v1290 = vpop.trf.xlu0
        %v1291 = vpop.trf.xlu0
        %v1292 = vpop.trf.xlu0
        %v1293 = vpop.trf.xlu0
        %v1294 = vpop.trf.xlu0
        %v1295 = vpop.trf.xlu0
        %v1296 = vpop.trf.xlu0
        %v1297 = vpop.trf.xlu0
        %v1298 = vpop.trf.xlu0
        %v1299 = vpop.trf.xlu0
        %v1300 = vpop.trf.xlu0
        %1301 = vxpose.xlu0.b32.start [1/16] %v1114, 128
        %1302 = vxpose.xlu0.b32.cont [2/16] 0.0, 128
        %1303 = vxpose.xlu0.b32.cont [3/16] 0.0, 128
        %1304 = vxpose.xlu0.b32.cont [4/16] 0.0, 128
        %1305 = vxpose.xlu0.b32.cont [5/16] 0.0, 128
        %1306 = vxpose.xlu0.b32.cont [6/16] 0.0, 128
        %1307 = vxpose.xlu0.b32.cont [7/16] 0.0, 128
        %1308 = vxpose.xlu0.b32.cont [8/16] 0.0, 128
        %1309 = vxpose.xlu0.b32.cont [9/16] 0.0, 128
        %1310 = vxpose.xlu0.b32.cont [10/16] 0.0, 128
        %1311 = vxpose.xlu0.b32.cont [11/16] 0.0, 128
        %1312 = vxpose.xlu0.b32.cont [12/16] 0.0, 128
        %1313 = vxpose.xlu0.b32.cont [13/16] 0.0, 128
        %1314 = vxpose.xlu0.b32.cont [14/16] 0.0, 128
        %1315 = vxpose.xlu0.b32.cont [15/16] 0.0, 128
        %1316 = vxpose.xlu0.b32.end [16/16] 0.0, 128
        %v1317 = vpop.trf.xlu0
        %v1318 = vpop.trf.xlu0
        %v1319 = vpop.trf.xlu0
        %v1320 = vpop.trf.xlu0
        %v1321 = vpop.trf.xlu0
        %v1322 = vpop.trf.xlu0
        %v1323 = vpop.trf.xlu0
        %v1324 = vpop.trf.xlu0
        %v1325 = vpop.trf.xlu0
        %v1326 = vpop.trf.xlu0
        %v1327 = vpop.trf.xlu0
        %v1328 = vpop.trf.xlu0
        %v1329 = vpop.trf.xlu0
        %v1330 = vpop.trf.xlu0
        %v1331 = vpop.trf.xlu0
        %v1332 = vpop.trf.xlu0
        %1333 = vxpose.xlu0.b32.start [1/16] %v1190, 128
        %1334 = vxpose.xlu0.b32.cont [2/16] 0.0, 128
        %1335 = vxpose.xlu0.b32.cont [3/16] 0.0, 128
        %1336 = vxpose.xlu0.b32.cont [4/16] 0.0, 128
        %1337 = vxpose.xlu0.b32.cont [5/16] 0.0, 128
        %1338 = vxpose.xlu0.b32.cont [6/16] 0.0, 128
        %1339 = vxpose.xlu0.b32.cont [7/16] 0.0, 128
        %1340 = vxpose.xlu0.b32.cont [8/16] 0.0, 128
        %1341 = vxpose.xlu0.b32.cont [9/16] 0.0, 128
        %1342 = vxpose.xlu0.b32.cont [10/16] 0.0, 128
        %1343 = vxpose.xlu0.b32.cont [11/16] 0.0, 128
        %1344 = vxpose.xlu0.b32.cont [12/16] 0.0, 128
        %1345 = vxpose.xlu0.b32.cont [13/16] 0.0, 128
        %1346 = vxpose.xlu0.b32.cont [14/16] 0.0, 128
        %1347 = vxpose.xlu0.b32.cont [15/16] 0.0, 128
        %1348 = vxpose.xlu0.b32.end [16/16] 0.0, 128
        %v1349 = vpop.trf.xlu0
        %v1350 = vpop.trf.xlu0
        %v1351 = vpop.trf.xlu0
        %v1352 = vpop.trf.xlu0
        %v1353 = vpop.trf.xlu0
        %v1354 = vpop.trf.xlu0
        %v1355 = vpop.trf.xlu0
        %v1356 = vpop.trf.xlu0
        %v1357 = vpop.trf.xlu0
        %v1358 = vpop.trf.xlu0
        %v1359 = vpop.trf.xlu0
        %v1360 = vpop.trf.xlu0
        %v1361 = vpop.trf.xlu0
        %v1362 = vpop.trf.xlu0
        %v1363 = vpop.trf.xlu0
        %v1364 = vpop.trf.xlu0
        %1365 = vxpose.xlu0.b32.start [1/16] %v1266, 128
        %1366 = vxpose.xlu0.b32.cont [2/16] 0.0, 128
        %1367 = vxpose.xlu0.b32.cont [3/16] 0.0, 128
        %1368 = vxpose.xlu0.b32.cont [4/16] 0.0, 128
        %1369 = vxpose.xlu0.b32.cont [5/16] 0.0, 128
        %1370 = vxpose.xlu0.b32.cont [6/16] 0.0, 128
        %1371 = vxpose.xlu0.b32.cont [7/16] 0.0, 128
        %1372 = vxpose.xlu0.b32.cont [8/16] 0.0, 128
        %1373 = vxpose.xlu0.b32.cont [9/16] 0.0, 128
        %1374 = vxpose.xlu0.b32.cont [10/16] 0.0, 128
        %1375 = vxpose.xlu0.b32.cont [11/16] 0.0, 128
        %1376 = vxpose.xlu0.b32.cont [12/16] 0.0, 128
        %1377 = vxpose.xlu0.b32.cont [13/16] 0.0, 128
        %1378 = vxpose.xlu0.b32.cont [14/16] 0.0, 128
        %1379 = vxpose.xlu0.b32.cont [15/16] 0.0, 128
        %1380 = vxpose.xlu0.b32.end [16/16] 0.0, 128
        %v1381 = vpop.trf.xlu0
        %v1382 = vpop.trf.xlu0
        %v1383 = vpop.trf.xlu0
        %v1384 = vpop.trf.xlu0
        %v1385 = vpop.trf.xlu0
        %v1386 = vpop.trf.xlu0
        %v1387 = vpop.trf.xlu0
        %v1388 = vpop.trf.xlu0
        %v1389 = vpop.trf.xlu0
        %v1390 = vpop.trf.xlu0
        %v1391 = vpop.trf.xlu0
        %v1392 = vpop.trf.xlu0
        %v1393 = vpop.trf.xlu0
        %v1394 = vpop.trf.xlu0
        %v1395 = vpop.trf.xlu0
        %v1396 = vpop.trf.xlu0
        %v1397 = vcombine.low %v1285, %v1349
        %v1398 = vcombine.high %v1285, %v1349
        %v1400 = vunpack.c.l.s4 1983009808
        %v1401 = vunpack.c.0.s8 %v1400
        %v1402 = vlaneseq
        %v1403 = vshrl.u32 %v1402, 7
        %v1404 = vsub.s32 %v1401, %v1403
        %v1405 = vrot.slane %v1397, %v1404
        %v1407 = vunpack.c.l.s4 1983009808
        %v1408 = vunpack.c.0.s8 %v1407
        %v1409 = vlaneseq
        %v1410 = vshrl.u32 %v1409, 7
        %v1411 = vsub.s32 %v1408, %v1410
        %v1412 = vrot.slane %v1398, %v1411
        %v1413 = vcombine.low %v1317, %v1381
        %v1414 = vcombine.high %v1317, %v1381
        %v1416 = vunpack.c.l.s4 1983009808
        %v1417 = vunpack.c.0.s8 %v1416
        %v1418 = vlaneseq
        %v1419 = vshrl.u32 %v1418, 7
        %v1420 = vsub.s32 %v1417, %v1419
        %v1421 = vrot.slane %v1413, %v1420
        %v1423 = vunpack.c.l.s4 1983009808
        %v1424 = vunpack.c.0.s8 %v1423
        %v1425 = vlaneseq
        %v1426 = vshrl.u32 %v1425, 7
        %v1427 = vsub.s32 %v1424, %v1426
        %v1428 = vrot.slane %v1414, %v1427
        %v1429 = vcombine.low %v1405, %v1421
        %v1430 = vcombine.high %v1405, %v1421
        %v1432 = vunpack.c.l.s4 1934713408
        %v1433 = vunpack.c.0.s8 %v1432
        %v1434 = vlaneseq
        %v1435 = vshrl.u32 %v1434, 7
        %v1436 = vsub.s32 %v1433, %v1435
        %v1437 = vrot.slane %v1429, %v1436
        %v1439 = vunpack.c.l.s4 1934713408
        %v1440 = vunpack.c.0.s8 %v1439
        %v1441 = vlaneseq
        %v1442 = vshrl.u32 %v1441, 7
        %v1443 = vsub.s32 %v1440, %v1442
        %v1444 = vrot.slane %v1430, %v1443
        %v1445 = vcombine.low %v1412, %v1428
        %v1446 = vcombine.high %v1412, %v1428
        %v1448 = vunpack.c.l.s4 1934713408
        %v1449 = vunpack.c.0.s8 %v1448
        %v1450 = vlaneseq
        %v1451 = vshrl.u32 %v1450, 7
        %v1452 = vsub.s32 %v1449, %v1451
        %v1453 = vrot.slane %v1445, %v1452
        %v1455 = vunpack.c.l.s4 1934713408
        %v1456 = vunpack.c.0.s8 %v1455
        %v1457 = vlaneseq
        %v1458 = vshrl.u32 %v1457, 7
        %v1459 = vsub.s32 %v1456, %v1458
        %v1460 = vrot.slane %v1446, %v1459
        %v1461 = vcombine.high %v1437, 0.0
        %v1462 = vcombine.high %v1444, 0.0
        %v1463 = vcombine.high %v1453, 0.0
        %v1464 = vcombine.high %v1460, 0.0
        %v1465 = vcombine.low %v1437, %v1444
        %v1467 = vunpack.c.l.s4 1983009808
        %v1468 = vunpack.c.0.s8 %v1467
        %v1469 = vlaneseq
        %v1470 = vshrl.u32 %v1469, 7
        %v1471 = vsub.s32 %v1468, %v1470
        %v1472 = vrot.slane %v1465, %v1471
        %v1473 = vcombine.low %v1461, %v1462
        %v1475 = vunpack.c.l.s4 1983009808
        %v1476 = vunpack.c.0.s8 %v1475
        %v1477 = vlaneseq
        %v1478 = vshrl.u32 %v1477, 7
        %v1479 = vsub.s32 %v1476, %v1478
        %v1480 = vrot.slane %v1473, %v1479
        %v1481 = vcombine.low %v1453, %v1460
        %v1483 = vunpack.c.l.s4 1983009808
        %v1484 = vunpack.c.0.s8 %v1483
        %v1485 = vlaneseq
        %v1486 = vshrl.u32 %v1485, 7
        %v1487 = vsub.s32 %v1484, %v1486
        %v1488 = vrot.slane %v1481, %v1487
        %v1489 = vcombine.low %v1463, %v1464
        %v1491 = vunpack.c.l.s4 1983009808
        %v1492 = vunpack.c.0.s8 %v1491
        %v1493 = vlaneseq
        %v1494 = vshrl.u32 %v1493, 7
        %v1495 = vsub.s32 %v1492, %v1494
        %v1496 = vrot.slane %v1489, %v1495
        %v1497 = vcombine.low %v1472, %v1480
        %v1498 = vcombine.high %v1472, %v1480
        %v1500 = vunpack.c.l.s4 1934713408
        %v1501 = vunpack.c.0.s8 %v1500
        %v1502 = vlaneseq
        %v1503 = vshrl.u32 %v1502, 7
        %v1504 = vsub.s32 %v1501, %v1503
        %v1505 = vrot.slane %v1497, %v1504
        %v1507 = vunpack.c.l.s4 1934713408
        %v1508 = vunpack.c.0.s8 %v1507
        %v1509 = vlaneseq
        %v1510 = vshrl.u32 %v1509, 7
        %v1511 = vsub.s32 %v1508, %v1510
        %v1512 = vrot.slane %v1498, %v1511
        %v1513 = vcombine.low %v1488, %v1496
        %v1514 = vcombine.high %v1488, %v1496
        %v1516 = vunpack.c.l.s4 1934713408
        %v1517 = vunpack.c.0.s8 %v1516
        %v1518 = vlaneseq
        %v1519 = vshrl.u32 %v1518, 7
        %v1520 = vsub.s32 %v1517, %v1519
        %v1521 = vrot.slane %v1513, %v1520
        %v1523 = vunpack.c.l.s4 1934713408
        %v1524 = vunpack.c.0.s8 %v1523
        %v1525 = vlaneseq
        %v1526 = vshrl.u32 %v1525, 7
        %v1527 = vsub.s32 %v1524, %v1526
        %v1528 = vrot.slane %v1514, %v1527
        %v1529 = vcombine.low %v1505, %v1521
        %v1530 = vcombine.high %v1505, %v1521
        %v1531 = vcombine.low %v1512, %v1528
        %v1532 = vcombine.high %v1512, %v1528
        %1534 = vrot.lane.b32.xlu0 %v1530, 8
        %v1535 = vpop.permute.xlu0 %1534
        %1538 = vrot.lane.b32.xlu0 %v1531, 16
        %v1539 = vpop.permute.xlu0 %1538
        %1542 = vrot.lane.b32.xlu0 %v1532, 24
        %v1543 = vpop.permute.xlu0 %1542
        %v1545 = vsel %vm488, %v1529, %v1535
        %vm1546 = vcmask 130048
        %v1547 = vsel %vm1546, %v1545, %v1539
        %vm1548 = vcmask 195584
        %v1549 = vsel %vm1548, %v1547, %v1543
        %v1550 = vadd.f32 %v1549, %v255
        %v1551 = vsel %vm267, %v1550, 0.0
        %1552 = vadd.xlane.f32.xlu0 %v1551
        %v1553 = vpop.xlane.xlu0 %1552
        %v1554 = vrcp.pop 32.0
        %v1555 = vmul.f32 %v1553, %v1554
        %v1556 = vsub.f32 %v1550, %v1555
        %v1557 = vmul.f32 %v1556, %v1556
        %v1558 = vsel %vm267, %v1557, 0.0
        %1559 = vadd.xlane.f32.xlu0 %v1558
        %v1560 = vpop.xlane.xlu0 %1559
        %v1561 = vmul.f32 %v1560, %v1554
        %v1562 = vadd.f32 %v1561, 1e-05
        %v1563 = vrsqrt.pop %v1562
        %v1564 = vmul.f32 %v1556, %v1563
        %v1565 = vld [vmem:[%s3] sm:$0x1]
        %v1567 = vlaneseq
        %v1568 = vshrl.u32 %v1567, 7
        %v1569 = vsub.s32 0, %v1568
        %v1570 = vrot.slane %v1565, %v1569
        %v1572 = vmul.f32 %v1564, %v1570
        %v1573 = vld [vmem:[%s4] sm:$0x1]
        %v1575 = vlaneseq
        %v1576 = vshrl.u32 %v1575, 7
        %v1577 = vsub.s32 0, %v1576
        %v1578 = vrot.slane %v1573, %v1577
        %v1580 = vadd.f32 %v1572, %v1578
        %1581 = vst.msk [vmem:[%s254] sm:$0xff] %vm267, %v1580
        %s1582 = sand.u32 %s141, 1
        %s1583 = scalar_lea.sflag [#allocation4], %s1582
        %s1584 = sand.u32 %s141, 1
        %s1585 = smul.addr %s1584, 8
        %s1586 = scalar_lea.vmem [#allocation7], %s1585
        // Predicated region
        $region49: #{tpu_custom_call.1} parent=39 // pred_check
          %p1587 = pneg %p151
        $region50: #{tpu_custom_call.1} parent=39 // pred_check_branch
          %1589 = sbr.rel (%p1587) target = $region52
        $region51: #{tpu_custom_call.1} parent=39 // pred_region
          %s1591 = ssub.s32 128, 128
          %1592 = vsyncadd %s1583, %s1591
          %s1593 = smul.addr %s23, 128
          %s1594 = scalar_lea.hbm %s5, %s1593
          %s1596 = sshll.u32 %s1586, 4
          %s1597 = int_to_ptr.vmem [resolvable:$true] %s1596
          %1599 = dma.vmem_to_hbm [thread:$0]  %s1597, 128, %s1594, %s1583
        $region52: #{tpu_custom_call.1} parent=39 // pred_fallthru
          _
      $region40: #{tpu_custom_call.1} parent=5 // pred_fallthru
        _
      %p1600 = scmp.le.s32.totalorder 2, %s18
      // Predicated region
      $region53: #{tpu_custom_call.1} parent=5 // pred_check
        %p1601 = pneg %p1600
      $region54: #{tpu_custom_call.1} parent=5 // pred_check_branch
        %1603 = sbr.rel (%p1601) target = $region56
      $region55: #{tpu_custom_call.1} parent=5 // pred_region
        %s1604 = ssub.s32 %s18, 2
        // Predicated region
        $region57: #{tpu_custom_call.1} parent=55 // pred_check
          %p1605 = pneg %p157
        $region58: #{tpu_custom_call.1} parent=55 // pred_check_branch
          %1607 = sbr.rel (%p1605) target = $region60
        $region59: #{tpu_custom_call.1} parent=55 // pred_region
          %s1608 = sand.u32 %s142, 1
          %s1609 = scalar_lea.sflag [#allocation4], %s1608
          %s1610 = sand.u32 %s142, 1
          %s1611 = smul.addr %s1610, 8
          %s1612 = scalar_lea.vmem [#allocation7], %s1611
          %1613 = dma.done %s1609, 128
        $region60: #{tpu_custom_call.1} parent=55 // pred_fallthru
          _
      $region56: #{tpu_custom_call.1} parent=5 // pred_fallthru
        _
    $region6: #{tpu_custom_call.1} parent=1 // loop_footer
      %s22 = sadd.s32 1, %s18
    $region7: #{tpu_custom_call.1} parent=1 // loop_footer_branch
      %17 = sbr.rel target = $region3
    $region8: #{tpu_custom_call.1} parent=1 // loop_exit
      _
    %1614 = vsyncpa [#allocation3], 1
    %s1615 = scalar_lea.sflag [#allocation3], 1
    %1616 = vsyncpa %s1615, 1
    %1617 = vsyncpa [#allocation6], 1
    %1618 = vsyncpa [#allocation4], 1
    %s1619 = scalar_lea.sflag [#allocation4], 1
    %1620 = vsyncpa %s1619, 1

</llo_original>
